<compile_context>
chip_gen: v6e
topology: v6e:2x2x1
jax: 0.10.0
libtpu: 0.0.40
codegen_flags: <defaults>
</compile_context>

<pallas_src>
import math
from functools import partial

import jax
import jax.numpy as jnp
from jax.experimental import pallas as pl
from jax.experimental.pallas import tpu as pltpu

BN_EPS = 1e-5
PRELU_ALPHA = 0.25          # nn.PReLU() default (single shared slope)
LANE = 128                  # TPU lane width: keep feature dims lane-dense


def _round_up(n, m):
    return ((n + m - 1) // m) * m


def fold_bn(gamma, beta, running_mean, running_var, eps=BN_EPS):
    """Fold eval-mode BatchNorm1d into a per-feature affine (scale, shift)."""
    scale = gamma / jnp.sqrt(running_var + eps)
    shift = beta - running_mean * scale
    return scale, shift


# ----------------------------------------------------------------------------
# Fused whole-network kernel
#   grid = (row tiles,) ; weights resident in VMEM (grid-invariant blocks);
#   h0 + running activation kept in f32 VMEM scratch, never written to HBM.
# ----------------------------------------------------------------------------
def _make_fused_kernel(n_layers, layer0_residual, last_residual, alpha):
    def kernel(*refs):
        x_ref = refs[0]
        wb = refs[1:1 + 2 * n_layers]               # (w0, b0, w1, b1, ...)
        o_ref = refs[1 + 2 * n_layers]
        h0_ref = refs[2 + 2 * n_layers]             # VMEM f32 scratch
        act_ref = refs[3 + 2 * n_layers]            # VMEM f32 scratch

        def prelu(v):                                # f32 epilogue math
            return jnp.where(v > 0, v, alpha * v)

        def layer(lhs_bf16, li):
            # bf16 x bf16 -> f32 on the MXU.  BN scale is already folded into
            # the weight columns, so the epilogue is just the f32 shift add.
            y = jnp.dot(lhs_bf16, wb[2 * li][...],
                        preferred_element_type=jnp.float32)
            return y + wb[2 * li + 1][...]

        # ---- layer 0 : Dense(in_feats, hidden)  [+ x if in_feats == hidden]
        x_in = x_ref[...]                            # bf16 (tm, K0p)
        y = layer(x_in, 0)
        if layer0_residual:                          # trace-time guard (K == N)
            y = y + x_in.astype(jnp.float32)
        h0_ref[...] = y
        act_ref[...] = y

        # ---- middle : residualayer(hidden, hidden): BN((prelu(x)+h0) @ W), no skip
        for li in range(1, n_layers - 1):
            xi = prelu(act_ref[...])
            support = (xi + h0_ref[...]).astype(jnp.bfloat16)
            act_ref[...] = layer(support, li)

        # ---- last : Dense(hidden, out_feats) [+ prelu(x) if hidden == out_feats]
        xi = prelu(act_ref[...])
        y = layer(xi.astype(jnp.bfloat16), n_layers - 1)
        if last_residual:
            y = y + xi                               # residual stays in f32
        o_ref[...] = y.astype(o_ref.dtype)

    return kernel


# ----------------------------------------------------------------------------
# Host-side parameter prep (do once): fold BN scale into W, pad feature dims to
# the 128-lane boundary, cast matmul operands to bf16.
# ----------------------------------------------------------------------------
def prepare_params(params, in_feats, hidden, out_feats):
    n_layers = len(params)
    dims = [(in_feats, hidden)] + [(hidden, hidden)] * (n_layers - 2) \
         + [(hidden, out_feats)]
    prepared = []
    for (w, scale, shift), (fi, fo) in zip(params, dims):
        fip, fop = _round_up(fi, LANE), _round_up(fo, LANE)
        ws = (w.astype(jnp.float32) * scale[None, :]).astype(jnp.bfloat16)
        wp = jnp.zeros((fip, fop), jnp.bfloat16).at[:fi, :fo].set(ws)
        bp = jnp.zeros((1, fop), jnp.float32).at[0, :fo].set(
            shift.astype(jnp.float32))
        prepared.append((wp, bp))
    return prepared


# ----------------------------------------------------------------------------
# Full forward pass (FeedForwardNetIII.forward, eval mode) — one pallas_call.
# ----------------------------------------------------------------------------
def feedforward_net_iii(x, prepared, *, in_feats, hidden, out_feats,
                        tm=256, alpha=PRELU_ALPHA):
    n_layers = len(prepared)
    assert n_layers >= 2  # TODO(synk): n_layers == 1 (plain bias-free Linear) not implemented
    M = x.shape[0]
    k0p = prepared[0][0].shape[0]        # padded in_feats
    hp = prepared[0][0].shape[1]         # padded hidden
    outp = prepared[-1][0].shape[1]      # padded out_feats

    mp = _round_up(M, tm)                # pad rows to the tile (arbitrary M ok)
    grid = mp // tm

    # Row + lane padding of the input; bf16 halves HBM read bytes.  Zero-padded
    # feature columns stay exactly zero through every layer (zero weight rows /
    # columns, zero shift), so valid outputs are unchanged.
    xp = jnp.zeros((mp, k0p), jnp.bfloat16).at[:M, :in_feats].set(
        x.astype(jnp.bfloat16))

    in_specs = [pl.BlockSpec((tm, k0p), lambda i: (i, 0))]
    args = [xp]
    for wp, bp in prepared:
        kp, np_ = wp.shape
        # Grid-invariant blocks: constant index_map => DMA'd once, VMEM-resident.
        in_specs.append(pl.BlockSpec((kp, np_), lambda i: (0, 0)))
        in_specs.append(pl.BlockSpec((1, np_), lambda i: (0, 0)))
        args += [wp, bp]

    # Explicit VMEM budget: 2x (pipelined) x/out buffers, 2x (double-buffered)
    # resident weights + shifts, two f32 scratch slabs, plus headroom.
    buf = 2 * tm * k0p * 2 + 2 * tm * outp * 4
    for wp, bp in prepared:
        buf += 2 * wp.size * 2 + 2 * bp.size * 4
    buf += 2 * tm * hp * 4
    vmem_limit = min(48 << 20, max(2 * buf + (8 << 20), 16 << 20))

    kernel = _make_fused_kernel(
        n_layers,
        layer0_residual=(in_feats == hidden),
        last_residual=(hidden == out_feats),
        alpha=alpha)

    out = pl.pallas_call(
        kernel,
        out_shape=jax.ShapeDtypeStruct((mp, outp), jnp.float32),
        grid=(grid,),
        in_specs=in_specs,
        out_specs=pl.BlockSpec((tm, outp), lambda i: (i, 0)),
        scratch_shapes=[pltpu.VMEM((tm, hp), jnp.float32),    # h0
                        pltpu.VMEM((tm, hp), jnp.float32)],   # running activation
        compiler_params=pltpu.CompilerParams(
            dimension_semantics=("parallel",),
            vmem_limit_bytes=vmem_limit),
    )(*args)

    return out[:M, :out_feats]


# ----------------------------------------------------------------------------
# Parameter init (mirrors reset_parameters of Dense / residualayer)
# ----------------------------------------------------------------------------
def init_params(key, in_feats, hidden, out_feats, n_layers):
    assert n_layers >= 2
    dims = [(in_feats, hidden)] + [(hidden, hidden)] * (n_layers - 2) \
         + [(hidden, out_feats)]
    params = []
    keys = jax.random.split(key, n_layers)
    for k, (fi, fo) in zip(keys, dims):
        stdv = 1.0 / math.sqrt(fo)                       # uniform(-stdv, stdv)
        w = jax.random.uniform(k, (fi, fo), jnp.float32, -stdv, stdv)
        # eval-mode BatchNorm1d with fresh stats: gamma=1, beta=0, mean=0, var=1
        scale, shift = fold_bn(jnp.ones((fo,), jnp.float32),
                               jnp.zeros((fo,), jnp.float32),
                               jnp.zeros((fo,), jnp.float32),
                               jnp.ones((fo,), jnp.float32))
        params.append((w, scale, shift))
    return params


# ----------------------------------------------------------------------------
# Pure-JAX reference with the SAME numerics (bf16 matmul operands, f32 epilogue)
# ----------------------------------------------------------------------------
def reference_forward(x, params, in_feats, hidden, out_feats):
    def prelu(v):
        return jnp.where(v > 0, v, PRELU_ALPHA * v)

    def mm(lhs_f32, w, scale, shift):
        wb = (w * scale[None, :]).astype(jnp.bfloat16)
        return jnp.dot(lhs_f32.astype(jnp.bfloat16), wb,
                       preferred_element_type=jnp.float32) + shift[None, :]

    n_layers = len(params)
    xb = x.astype(jnp.bfloat16).astype(jnp.float32)      # kernel input is bf16
    w, s, b = params[0]
    y = mm(xb, w, s, b)
    if in_feats == hidden:
        y = y + xb
    h0 = y
    act = y
    for li in range(1, n_layers - 1):
        w, s, b = params[li]
        act = mm(prelu(act) + h0, w, s, b)               # residualayer: no skip
    w, s, b = params[-1]
    xi = prelu(act)
    y = mm(xi, w, s, b)
    if hidden == out_feats:
        y = y + xi
    return y


if __name__ == "__main__":
    # Small shapes consistent with the module; node count deliberately NOT a
    # multiple of the row tile to exercise the padding path.
    num_nodes = 300
    in_feats, hidden, out_feats = 32, 64, 64
    n_layers = 4

    key = jax.random.PRNGKey(0)
    kx, kp = jax.random.split(key)
    x = jax.random.normal(kx, (num_nodes, in_feats), jnp.float32)
    params = init_params(kp, in_feats, hidden, out_feats, n_layers)

    prepared = prepare_params(params, in_feats, hidden, out_feats)
    fwd = jax.jit(partial(feedforward_net_iii, in_feats=in_feats,
                          hidden=hidden, out_feats=out_feats))
    out = jax.block_until_ready(fwd(x, prepared))

    ref = reference_forward(x, params, in_feats, hidden, out_feats)
    assert out.shape == (num_nodes, out_feats)
    err = jnp.max(jnp.abs(out - ref))
    assert jnp.allclose(out, ref, atol=2e-3, rtol=2e-3), f"max abs err = {err}"

    print("KERNEL_OK")
</pallas_src>

<mosaic_0001>
module attributes {stable_mosaic.version = 11 : i64} {
  func.func @kernel(%arg0: i32, %arg1: memref<256x128xbf16, #tpu.memory_space<vmem>>, %arg2: memref<128x128xbf16, #tpu.memory_space<vmem>>, %arg3: memref<1x128xf32, #tpu.memory_space<vmem>>, %arg4: memref<128x128xbf16, #tpu.memory_space<vmem>>, %arg5: memref<1x128xf32, #tpu.memory_space<vmem>>, %arg6: memref<128x128xbf16, #tpu.memory_space<vmem>>, %arg7: memref<1x128xf32, #tpu.memory_space<vmem>>, %arg8: memref<128x128xbf16, #tpu.memory_space<vmem>>, %arg9: memref<1x128xf32, #tpu.memory_space<vmem>>, %arg10: memref<256x128xf32, #tpu.memory_space<vmem>>, %arg11: memref<256x128xf32, #tpu.memory_space<vmem>>, %arg12: memref<256x128xf32, #tpu.memory_space<vmem>>) attributes {dimension_semantics = [#tpu.dimension_semantics<parallel>], iteration_bounds = array<i64: 2>, scalar_prefetch = 0 : i64, scratch_operands = 2 : i64, tpu.core_type = #tpu.core_type<tc>, window_params = [{transform_indices = @transform_0, window_bounds = array<i64: 256, 128>}, {pipeline_mode = #tpu.pipeline_mode<synchronous>, transform_indices = @transform_1, window_bounds = array<i64: 128, 128>}, {pipeline_mode = #tpu.pipeline_mode<synchronous>, transform_indices = @transform_2, window_bounds = array<i64: 1, 128>}, {pipeline_mode = #tpu.pipeline_mode<synchronous>, transform_indices = @transform_3, window_bounds = array<i64: 128, 128>}, {pipeline_mode = #tpu.pipeline_mode<synchronous>, transform_indices = @transform_4, window_bounds = array<i64: 1, 128>}, {pipeline_mode = #tpu.pipeline_mode<synchronous>, transform_indices = @transform_5, window_bounds = array<i64: 128, 128>}, {pipeline_mode = #tpu.pipeline_mode<synchronous>, transform_indices = @transform_6, window_bounds = array<i64: 1, 128>}, {pipeline_mode = #tpu.pipeline_mode<synchronous>, transform_indices = @transform_7, window_bounds = array<i64: 128, 128>}, {pipeline_mode = #tpu.pipeline_mode<synchronous>, transform_indices = @transform_8, window_bounds = array<i64: 1, 128>}, {transform_indices = @transform_9, window_bounds = array<i64: 256, 128>}]} {
    %c0 = arith.constant 0 : index
    %c0_0 = arith.constant 0 : index
    %0 = vector.load %arg1[%c0, %c0_0] : memref<256x128xbf16, #tpu.memory_space<vmem>>, vector<256x128xbf16>
    %c0_1 = arith.constant 0 : index
    %c0_2 = arith.constant 0 : index
    %1 = vector.load %arg2[%c0_1, %c0_2] : memref<128x128xbf16, #tpu.memory_space<vmem>>, vector<128x128xbf16>
    %cst = arith.constant dense<0.000000e+00> : vector<256x128xf32>
    %2 = tpu.matmul %0, %1, %cst {dimension_numbers = #tpu.dot_dimension_numbers<[1], [0], [0], [1], [0, 0, 1, 1], [], []>} : vector<256x128xbf16>, vector<128x128xbf16>, vector<256x128xf32> -> vector<256x128xf32>
    %c0_3 = arith.constant 0 : index
    %c0_4 = arith.constant 0 : index
    %3 = vector.load %arg3[%c0_3, %c0_4] : memref<1x128xf32, #tpu.memory_space<vmem>>, vector<1x128xf32>
    %4 = vector.broadcast %3 : vector<1x128xf32> to vector<256x128xf32>
    %5 = arith.addf %2, %4 : vector<256x128xf32>
    %c0_5 = arith.constant 0 : index
    %c0_6 = arith.constant 0 : index
    %6 = vector.load %arg11[%c0_5, %c0_6] : memref<256x128xf32, #tpu.memory_space<vmem>>, vector<256x128xf32>
    tpu.vector_store %arg11[%c0_5, %c0_6], %5 {strides = array<i32>} : memref<256x128xf32, #tpu.memory_space<vmem>>, vector<256x128xf32>,
    %c0_7 = arith.constant 0 : index
    %c0_8 = arith.constant 0 : index
    %7 = vector.load %arg12[%c0_7, %c0_8] : memref<256x128xf32, #tpu.memory_space<vmem>>, vector<256x128xf32>
    tpu.vector_store %arg12[%c0_7, %c0_8], %5 {strides = array<i32>} : memref<256x128xf32, #tpu.memory_space<vmem>>, vector<256x128xf32>,
    %c0_9 = arith.constant 0 : index
    %c0_10 = arith.constant 0 : index
    %8 = vector.load %arg12[%c0_9, %c0_10] : memref<256x128xf32, #tpu.memory_space<vmem>>, vector<256x128xf32>
    %cst_11 = arith.constant 0.000000e+00 : f32
    %9 = vector.broadcast %cst_11 : f32 to vector<256x128xf32>
    %10 = arith.cmpf ogt, %8, %9 : vector<256x128xf32>
    %cst_12 = arith.constant 2.500000e-01 : f32
    %11 = vector.broadcast %cst_12 : f32 to vector<256x128xf32>
    %12 = arith.mulf %11, %8 : vector<256x128xf32>
    %13 = arith.select %10, %8, %12 : vector<256x128xi1>, vector<256x128xf32>
    %c0_13 = arith.constant 0 : index
    %c0_14 = arith.constant 0 : index
    %14 = vector.load %arg11[%c0_13, %c0_14] : memref<256x128xf32, #tpu.memory_space<vmem>>, vector<256x128xf32>
    %15 = arith.addf %13, %14 : vector<256x128xf32>
    %16 = arith.truncf %15 : vector<256x128xf32> to vector<256x128xbf16>
    %c0_15 = arith.constant 0 : index
    %c0_16 = arith.constant 0 : index
    %17 = vector.load %arg4[%c0_15, %c0_16] : memref<128x128xbf16, #tpu.memory_space<vmem>>, vector<128x128xbf16>
    %cst_17 = arith.constant dense<0.000000e+00> : vector<256x128xf32>
    %18 = tpu.matmul %16, %17, %cst_17 {dimension_numbers = #tpu.dot_dimension_numbers<[1], [0], [0], [1], [0, 0, 1, 1], [], []>} : vector<256x128xbf16>, vector<128x128xbf16>, vector<256x128xf32> -> vector<256x128xf32>
    %c0_18 = arith.constant 0 : index
    %c0_19 = arith.constant 0 : index
    %19 = vector.load %arg5[%c0_18, %c0_19] : memref<1x128xf32, #tpu.memory_space<vmem>>, vector<1x128xf32>
    %20 = vector.broadcast %19 : vector<1x128xf32> to vector<256x128xf32>
    %21 = arith.addf %18, %20 : vector<256x128xf32>
    %c0_20 = arith.constant 0 : index
    %c0_21 = arith.constant 0 : index
    %22 = vector.load %arg12[%c0_20, %c0_21] : memref<256x128xf32, #tpu.memory_space<vmem>>, vector<256x128xf32>
    tpu.vector_store %arg12[%c0_20, %c0_21], %21 {strides = array<i32>} : memref<256x128xf32, #tpu.memory_space<vmem>>, vector<256x128xf32>,
    %c0_22 = arith.constant 0 : index
    %c0_23 = arith.constant 0 : index
    %23 = vector.load %arg12[%c0_22, %c0_23] : memref<256x128xf32, #tpu.memory_space<vmem>>, vector<256x128xf32>
    %cst_24 = arith.constant 0.000000e+00 : f32
    %24 = vector.broadcast %cst_24 : f32 to vector<256x128xf32>
    %25 = arith.cmpf ogt, %23, %24 : vector<256x128xf32>
    %cst_25 = arith.constant 2.500000e-01 : f32
    %26 = vector.broadcast %cst_25 : f32 to vector<256x128xf32>
    %27 = arith.mulf %26, %23 : vector<256x128xf32>
    %28 = arith.select %25, %23, %27 : vector<256x128xi1>, vector<256x128xf32>
    %c0_26 = arith.constant 0 : index
    %c0_27 = arith.constant 0 : index
    %29 = vector.load %arg11[%c0_26, %c0_27] : memref<256x128xf32, #tpu.memory_space<vmem>>, vector<256x128xf32>
    %30 = arith.addf %28, %29 : vector<256x128xf32>
    %31 = arith.truncf %30 : vector<256x128xf32> to vector<256x128xbf16>
    %c0_28 = arith.constant 0 : index
    %c0_29 = arith.constant 0 : index
    %32 = vector.load %arg6[%c0_28, %c0_29] : memref<128x128xbf16, #tpu.memory_space<vmem>>, vector<128x128xbf16>
    %cst_30 = arith.constant dense<0.000000e+00> : vector<256x128xf32>
    %33 = tpu.matmul %31, %32, %cst_30 {dimension_numbers = #tpu.dot_dimension_numbers<[1], [0], [0], [1], [0, 0, 1, 1], [], []>} : vector<256x128xbf16>, vector<128x128xbf16>, vector<256x128xf32> -> vector<256x128xf32>
    %c0_31 = arith.constant 0 : index
    %c0_32 = arith.constant 0 : index
    %34 = vector.load %arg7[%c0_31, %c0_32] : memref<1x128xf32, #tpu.memory_space<vmem>>, vector<1x128xf32>
    %35 = vector.broadcast %34 : vector<1x128xf32> to vector<256x128xf32>
    %36 = arith.addf %33, %35 : vector<256x128xf32>
    %c0_33 = arith.constant 0 : index
    %c0_34 = arith.constant 0 : index
    %37 = vector.load %arg12[%c0_33, %c0_34] : memref<256x128xf32, #tpu.memory_space<vmem>>, vector<256x128xf32>
    tpu.vector_store %arg12[%c0_33, %c0_34], %36 {strides = array<i32>} : memref<256x128xf32, #tpu.memory_space<vmem>>, vector<256x128xf32>,
    %c0_35 = arith.constant 0 : index
    %c0_36 = arith.constant 0 : index
    %38 = vector.load %arg12[%c0_35, %c0_36] : memref<256x128xf32, #tpu.memory_space<vmem>>, vector<256x128xf32>
    %cst_37 = arith.constant 0.000000e+00 : f32
    %39 = vector.broadcast %cst_37 : f32 to vector<256x128xf32>
    %40 = arith.cmpf ogt, %38, %39 : vector<256x128xf32>
    %cst_38 = arith.constant 2.500000e-01 : f32
    %41 = vector.broadcast %cst_38 : f32 to vector<256x128xf32>
    %42 = arith.mulf %41, %38 : vector<256x128xf32>
    %43 = arith.select %40, %38, %42 : vector<256x128xi1>, vector<256x128xf32>
    %44 = arith.truncf %43 : vector<256x128xf32> to vector<256x128xbf16>
    %c0_39 = arith.constant 0 : index
    %c0_40 = arith.constant 0 : index
    %45 = vector.load %arg8[%c0_39, %c0_40] : memref<128x128xbf16, #tpu.memory_space<vmem>>, vector<128x128xbf16>
    %cst_41 = arith.constant dense<0.000000e+00> : vector<256x128xf32>
    %46 = tpu.matmul %44, %45, %cst_41 {dimension_numbers = #tpu.dot_dimension_numbers<[1], [0], [0], [1], [0, 0, 1, 1], [], []>} : vector<256x128xbf16>, vector<128x128xbf16>, vector<256x128xf32> -> vector<256x128xf32>
    %c0_42 = arith.constant 0 : index
    %c0_43 = arith.constant 0 : index
    %47 = vector.load %arg9[%c0_42, %c0_43] : memref<1x128xf32, #tpu.memory_space<vmem>>, vector<1x128xf32>
    %48 = vector.broadcast %47 : vector<1x128xf32> to vector<256x128xf32>
    %49 = arith.addf %46, %48 : vector<256x128xf32>
    %50 = arith.addf %49, %43 : vector<256x128xf32>
    %c0_44 = arith.constant 0 : index
    %c0_45 = arith.constant 0 : index
    %51 = vector.load %arg10[%c0_44, %c0_45] : memref<256x128xf32, #tpu.memory_space<vmem>>, vector<256x128xf32>
    tpu.vector_store %arg10[%c0_44, %c0_45], %50 {strides = array<i32>} : memref<256x128xf32, #tpu.memory_space<vmem>>, vector<256x128xf32>,
    return
  }
  func.func @transform_0(%arg0: i32) -> (i32, i32) {
    %c0_i32 = arith.constant 0 : i32
    %c0_i32_0 = arith.constant 0 : i32
    return %arg0, %c0_i32 : i32, i32
  }
  func.func @transform_1(%arg0: i32) -> (i32, i32) {
    %c0_i32 = arith.constant 0 : i32
    %c0_i32_0 = arith.constant 0 : i32
    %c0_i32_1 = arith.constant 0 : i32
    return %c0_i32, %c0_i32_0 : i32, i32
  }
  func.func @transform_2(%arg0: i32) -> (i32, i32) {
    %c0_i32 = arith.constant 0 : i32
    %c0_i32_0 = arith.constant 0 : i32
    %c0_i32_1 = arith.constant 0 : i32
    return %c0_i32, %c0_i32_0 : i32, i32
  }
  func.func @transform_3(%arg0: i32) -> (i32, i32) {
    %c0_i32 = arith.constant 0 : i32
    %c0_i32_0 = arith.constant 0 : i32
    %c0_i32_1 = arith.constant 0 : i32
    return %c0_i32, %c0_i32_0 : i32, i32
  }
  func.func @transform_4(%arg0: i32) -> (i32, i32) {
    %c0_i32 = arith.constant 0 : i32
    %c0_i32_0 = arith.constant 0 : i32
    %c0_i32_1 = arith.constant 0 : i32
    return %c0_i32, %c0_i32_0 : i32, i32
  }
  func.func @transform_5(%arg0: i32) -> (i32, i32) {
    %c0_i32 = arith.constant 0 : i32
    %c0_i32_0 = arith.constant 0 : i32
    %c0_i32_1 = arith.constant 0 : i32
    return %c0_i32, %c0_i32_0 : i32, i32
  }
  func.func @transform_6(%arg0: i32) -> (i32, i32) {
    %c0_i32 = arith.constant 0 : i32
    %c0_i32_0 = arith.constant 0 : i32
    %c0_i32_1 = arith.constant 0 : i32
    return %c0_i32, %c0_i32_0 : i32, i32
  }
  func.func @transform_7(%arg0: i32) -> (i32, i32) {
    %c0_i32 = arith.constant 0 : i32
    %c0_i32_0 = arith.constant 0 : i32
    %c0_i32_1 = arith.constant 0 : i32
    return %c0_i32, %c0_i32_0 : i32, i32
  }
  func.func @transform_8(%arg0: i32) -> (i32, i32) {
    %c0_i32 = arith.constant 0 : i32
    %c0_i32_0 = arith.constant 0 : i32
    %c0_i32_1 = arith.constant 0 : i32
    return %c0_i32, %c0_i32_0 : i32, i32
  }
  func.func @transform_9(%arg0: i32) -> (i32, i32) {
    %c0_i32 = arith.constant 0 : i32
    %c0_i32_0 = arith.constant 0 : i32
    return %arg0, %c0_i32 : i32, i32
  }
}

</mosaic_0001>

<llo_original>
// kernel: feedforward_net_iii.1
$region0: #{feedforward_net_iii.1}
  #allocation0 [shape = 'u32[]', space=smem, size = 0x4, offset = 0x4, fixed_abs, tag = 'smem constant byte address 0x4 - core index']
  #allocation1 [shape = 'u32[144,128]{1,0:T(1,128)}', space=vmem, size = 0x12000, scoped, tag = 'internal scratch']
  #allocation2 [shape = 'f32[256,128]{1,0:T(8,128)}', space=vmem, size = 0x20000, scoped, tag = 'scratch operand']
  #allocation3 [shape = 'f32[256,128]{1,0:T(8,128)}', space=vmem, size = 0x20000, scoped, tag = 'scratch operand']
  %s0 = inlined_call_operand.vmem [shape: bf16[512,128], index: 0, kind: input, shape index: {}]
  %s1 = inlined_call_operand.vmem [shape: bf16[128,128], index: 1, kind: input, shape index: {}]
  %s2 = inlined_call_operand.vmem [shape: f32[1,128], index: 2, kind: input, shape index: {}]
  %s3 = inlined_call_operand.vmem [shape: bf16[128,128], index: 3, kind: input, shape index: {}]
  %s4 = inlined_call_operand.vmem [shape: f32[1,128], index: 4, kind: input, shape index: {}]
  %s5 = inlined_call_operand.vmem [shape: bf16[128,128], index: 5, kind: input, shape index: {}]
  %s6 = inlined_call_operand.vmem [shape: f32[1,128], index: 6, kind: input, shape index: {}]
  %s7 = inlined_call_operand.vmem [shape: bf16[128,128], index: 7, kind: input, shape index: {}]
  %s8 = inlined_call_operand.vmem [shape: f32[1,128], index: 8, kind: input, shape index: {}]
  %s9 = inlined_call_operand.vmem [shape: f32[512,128], index: 9, kind: output, shape index: {}]
  %s10 = sld [smem:[#allocation0]]
  $region69: #{feedforward_net_iii.1} parent=0
    _
  %s12 = ssub.s32 1, %s10
  %s13 = scalar_select 0, %s12, %s10
  loop: start=0, step=1, limit=4
  $region2: #{feedforward_net_iii.1} parent=0 // loop_pre_header
    _
  $region3: #{feedforward_net_iii.1} parent=0 // loop_header
    %s15 = sphi 0, %s19
    %p16 = scmp.ge.s32.totalorder %s15, 4
    %s25 = sphi 0, %s27
    %s28 = sphi 0, %s25
    %s29 = sphi 0, %s28
    %s45 = sphi 0, %s29
    %s49 = sphi 0, %s49
    %s51 = sphi 0, %s49
    %s52 = sphi 0, %s51
    %s66 = sphi 0, %s52
    %s70 = sphi 0, %s70
    %s72 = sphi 0, %s70
    %s73 = sphi 0, %s72
    %s87 = sphi 0, %s73
    %s91 = sphi 0, %s91
    %s93 = sphi 0, %s91
    %s94 = sphi 0, %s93
    %s108 = sphi 0, %s94
    %s112 = sphi 0, %s112
    %s114 = sphi 0, %s112
    %s115 = sphi 0, %s114
    %s129 = sphi 0, %s115
    %s133 = sphi 0, %s133
    %s135 = sphi 0, %s133
    %s136 = sphi 0, %s135
    %s150 = sphi 0, %s136
    %s154 = sphi 0, %s154
    %s156 = sphi 0, %s154
    %s157 = sphi 0, %s156
    %s171 = sphi 0, %s157
    %s175 = sphi 0, %s175
    %s177 = sphi 0, %s175
    %s178 = sphi 0, %s177
    %s192 = sphi 0, %s178
    %s196 = sphi 0, %s196
    %s198 = sphi 0, %s196
    %s199 = sphi 0, %s198
    %s213 = sphi 0, %s199
    %s219 = sphi 0, %s221
    %s222 = sphi 0, %s219
    %s223 = sphi 0, %s222
    %s239 = sphi 0, %s223
  $region4: #{feedforward_net_iii.1} parent=0 // loop_header_branch
    %18 = sbr.rel (%p16) target = $region8
  $region5: #{feedforward_net_iii.1} parent=0 // loop_body
    %s20 = ssub.s32 %s15, 1
    %s21 = ssub.s32 %s15, 2
    %s22 = sadd.s32 %s15, 1
    %s23 = ssub.s32 %s15, %s22
    %p24 = scmp.eq.s32.totalorder %s23, 0
    %s26 = sadd.s32 %s25, 1
    %s27 = scalar_select %p24, %s25, %s26
    %p30 = pneg %p24
    %p31 = scmp.eq.s32.totalorder %s15, 1
    %p32 = por %p30, %p31
    %p33 = scmp.ne.s32.totalorder %s25, %s28
    %p34 = scmp.eq.s32.totalorder %s15, 0
    %p35 = por %p33, %p34
    %p36 = scmp.ne.s32.totalorder %s25, %s28
    %p37 = scmp.eq.s32.totalorder %s20, 1
    %p38 = por %p36, %p37
    %p39 = scmp.ne.s32.totalorder %s28, %s29
    %p40 = scmp.eq.s32.totalorder %s20, 0
    %p41 = por %p39, %p40
    %p42 = scmp.ne.s32.totalorder %s28, %s29
    %p43 = scmp.eq.s32.totalorder %s21, 1
    %p44 = por %p42, %p43
    %p46 = scmp.ne.s32.totalorder %s29, %s45
    %p47 = scmp.eq.s32.totalorder %s21, 0
    %p48 = por %p46, %p47
    %s50 = sadd.s32 %s49, 1
    %p53 = scmp.eq.s32.totalorder %s15, 1
    %p54 = scmp.ne.s32.totalorder %s49, %s51
    %p55 = scmp.eq.s32.totalorder %s15, 0
    %p56 = por %p54, %p55
    %p57 = scmp.ne.s32.totalorder %s49, %s51
    %p58 = scmp.eq.s32.totalorder %s20, 1
    %p59 = por %p57, %p58
    %p60 = scmp.ne.s32.totalorder %s51, %s52
    %p61 = scmp.eq.s32.totalorder %s20, 0
    %p62 = por %p60, %p61
    %p63 = scmp.ne.s32.totalorder %s51, %s52
    %p64 = scmp.eq.s32.totalorder %s21, 1
    %p65 = por %p63, %p64
    %p67 = scmp.ne.s32.totalorder %s52, %s66
    %p68 = scmp.eq.s32.totalorder %s21, 0
    %p69 = por %p67, %p68
    %s71 = sadd.s32 %s70, 1
    %p74 = scmp.eq.s32.totalorder %s15, 1
    %p75 = scmp.ne.s32.totalorder %s70, %s72
    %p76 = scmp.eq.s32.totalorder %s15, 0
    %p77 = por %p75, %p76
    %p78 = scmp.ne.s32.totalorder %s70, %s72
    %p79 = scmp.eq.s32.totalorder %s20, 1
    %p80 = por %p78, %p79
    %p81 = scmp.ne.s32.totalorder %s72, %s73
    %p82 = scmp.eq.s32.totalorder %s20, 0
    %p83 = por %p81, %p82
    %p84 = scmp.ne.s32.totalorder %s72, %s73
    %p85 = scmp.eq.s32.totalorder %s21, 1
    %p86 = por %p84, %p85
    %p88 = scmp.ne.s32.totalorder %s73, %s87
    %p89 = scmp.eq.s32.totalorder %s21, 0
    %p90 = por %p88, %p89
    %s92 = sadd.s32 %s91, 1
    %p95 = scmp.eq.s32.totalorder %s15, 1
    %p96 = scmp.ne.s32.totalorder %s91, %s93
    %p97 = scmp.eq.s32.totalorder %s15, 0
    %p98 = por %p96, %p97
    %p99 = scmp.ne.s32.totalorder %s91, %s93
    %p100 = scmp.eq.s32.totalorder %s20, 1
    %p101 = por %p99, %p100
    %p102 = scmp.ne.s32.totalorder %s93, %s94
    %p103 = scmp.eq.s32.totalorder %s20, 0
    %p104 = por %p102, %p103
    %p105 = scmp.ne.s32.totalorder %s93, %s94
    %p106 = scmp.eq.s32.totalorder %s21, 1
    %p107 = por %p105, %p106
    %p109 = scmp.ne.s32.totalorder %s94, %s108
    %p110 = scmp.eq.s32.totalorder %s21, 0
    %p111 = por %p109, %p110
    %s113 = sadd.s32 %s112, 1
    %p116 = scmp.eq.s32.totalorder %s15, 1
    %p117 = scmp.ne.s32.totalorder %s112, %s114
    %p118 = scmp.eq.s32.totalorder %s15, 0
    %p119 = por %p117, %p118
    %p120 = scmp.ne.s32.totalorder %s112, %s114
    %p121 = scmp.eq.s32.totalorder %s20, 1
    %p122 = por %p120, %p121
    %p123 = scmp.ne.s32.totalorder %s114, %s115
    %p124 = scmp.eq.s32.totalorder %s20, 0
    %p125 = por %p123, %p124
    %p126 = scmp.ne.s32.totalorder %s114, %s115
    %p127 = scmp.eq.s32.totalorder %s21, 1
    %p128 = por %p126, %p127
    %p130 = scmp.ne.s32.totalorder %s115, %s129
    %p131 = scmp.eq.s32.totalorder %s21, 0
    %p132 = por %p130, %p131
    %s134 = sadd.s32 %s133, 1
    %p137 = scmp.eq.s32.totalorder %s15, 1
    %p138 = scmp.ne.s32.totalorder %s133, %s135
    %p139 = scmp.eq.s32.totalorder %s15, 0
    %p140 = por %p138, %p139
    %p141 = scmp.ne.s32.totalorder %s133, %s135
    %p142 = scmp.eq.s32.totalorder %s20, 1
    %p143 = por %p141, %p142
    %p144 = scmp.ne.s32.totalorder %s135, %s136
    %p145 = scmp.eq.s32.totalorder %s20, 0
    %p146 = por %p144, %p145
    %p147 = scmp.ne.s32.totalorder %s135, %s136
    %p148 = scmp.eq.s32.totalorder %s21, 1
    %p149 = por %p147, %p148
    %p151 = scmp.ne.s32.totalorder %s136, %s150
    %p152 = scmp.eq.s32.totalorder %s21, 0
    %p153 = por %p151, %p152
    %s155 = sadd.s32 %s154, 1
    %p158 = scmp.eq.s32.totalorder %s15, 1
    %p159 = scmp.ne.s32.totalorder %s154, %s156
    %p160 = scmp.eq.s32.totalorder %s15, 0
    %p161 = por %p159, %p160
    %p162 = scmp.ne.s32.totalorder %s154, %s156
    %p163 = scmp.eq.s32.totalorder %s20, 1
    %p164 = por %p162, %p163
    %p165 = scmp.ne.s32.totalorder %s156, %s157
    %p166 = scmp.eq.s32.totalorder %s20, 0
    %p167 = por %p165, %p166
    %p168 = scmp.ne.s32.totalorder %s156, %s157
    %p169 = scmp.eq.s32.totalorder %s21, 1
    %p170 = por %p168, %p169
    %p172 = scmp.ne.s32.totalorder %s157, %s171
    %p173 = scmp.eq.s32.totalorder %s21, 0
    %p174 = por %p172, %p173
    %s176 = sadd.s32 %s175, 1
    %p179 = scmp.eq.s32.totalorder %s15, 1
    %p180 = scmp.ne.s32.totalorder %s175, %s177
    %p181 = scmp.eq.s32.totalorder %s15, 0
    %p182 = por %p180, %p181
    %p183 = scmp.ne.s32.totalorder %s175, %s177
    %p184 = scmp.eq.s32.totalorder %s20, 1
    %p185 = por %p183, %p184
    %p186 = scmp.ne.s32.totalorder %s177, %s178
    %p187 = scmp.eq.s32.totalorder %s20, 0
    %p188 = por %p186, %p187
    %p189 = scmp.ne.s32.totalorder %s177, %s178
    %p190 = scmp.eq.s32.totalorder %s21, 1
    %p191 = por %p189, %p190
    %p193 = scmp.ne.s32.totalorder %s178, %s192
    %p194 = scmp.eq.s32.totalorder %s21, 0
    %p195 = por %p193, %p194
    %s197 = sadd.s32 %s196, 1
    %p200 = scmp.eq.s32.totalorder %s15, 1
    %p201 = scmp.ne.s32.totalorder %s196, %s198
    %p202 = scmp.eq.s32.totalorder %s15, 0
    %p203 = por %p201, %p202
    %p204 = scmp.ne.s32.totalorder %s196, %s198
    %p205 = scmp.eq.s32.totalorder %s20, 1
    %p206 = por %p204, %p205
    %p207 = scmp.ne.s32.totalorder %s198, %s199
    %p208 = scmp.eq.s32.totalorder %s20, 0
    %p209 = por %p207, %p208
    %p210 = scmp.ne.s32.totalorder %s198, %s199
    %p211 = scmp.eq.s32.totalorder %s21, 1
    %p212 = por %p210, %p211
    %p214 = scmp.ne.s32.totalorder %s199, %s213
    %p215 = scmp.eq.s32.totalorder %s21, 0
    %p216 = por %p214, %p215
    %s217 = ssub.s32 %s15, %s22
    %p218 = scmp.eq.s32.totalorder %s217, 0
    %s220 = sadd.s32 %s219, 1
    %s221 = scalar_select %p218, %s219, %s220
    %p224 = pneg %p218
    %p225 = scmp.eq.s32.totalorder %s15, 1
    %p226 = por %p224, %p225
    %p227 = scmp.ne.s32.totalorder %s219, %s222
    %p228 = scmp.eq.s32.totalorder %s15, 0
    %p229 = por %p227, %p228
    %p230 = scmp.ne.s32.totalorder %s219, %s222
    %p231 = scmp.eq.s32.totalorder %s20, 1
    %p232 = por %p230, %p231
    %p233 = scmp.ne.s32.totalorder %s222, %s223
    %p234 = scmp.eq.s32.totalorder %s20, 0
    %p235 = por %p233, %p234
    %p236 = scmp.ne.s32.totalorder %s222, %s223
    %p237 = scmp.eq.s32.totalorder %s21, 1
    %p238 = por %p236, %p237
    %p240 = scmp.ne.s32.totalorder %s223, %s239
    %p241 = scmp.eq.s32.totalorder %s21, 0
    %p242 = por %p240, %p241
    %p243 = scmp.le.s32.totalorder 1, %s15
    %p244 = scmp.lt.s32.totalorder %s15, 3
    %p245 = pnand %p243, %p244
    %p246 = pneg %p245
    // Predicated region
    $region9: #{feedforward_net_iii.1} parent=5 // pred_check
      _
    $region10: #{feedforward_net_iii.1} parent=5 // pred_check_branch
      %248 = sbr.rel (%p245) target = $region12
    $region11: #{feedforward_net_iii.1} parent=5 // pred_region
      %s249 = ssub.s32 %s15, 1
      // Predicated region
      $region13: #{feedforward_net_iii.1} parent=11 // pred_check
        %p250 = pneg %p62
      $region14: #{feedforward_net_iii.1} parent=11 // pred_check_branch
        %252 = sbr.rel (%p250) target = $region16
      $region15: #{feedforward_net_iii.1} parent=11 // pred_region
        _
      $region16: #{feedforward_net_iii.1} parent=11 // pred_fallthru
        _
      // Predicated region
      $region17: #{feedforward_net_iii.1} parent=11 // pred_check
        %p253 = pneg %p83
      $region18: #{feedforward_net_iii.1} parent=11 // pred_check_branch
        %255 = sbr.rel (%p253) target = $region20
      $region19: #{feedforward_net_iii.1} parent=11 // pred_region
        _
      $region20: #{feedforward_net_iii.1} parent=11 // pred_fallthru
        _
      // Predicated region
      $region21: #{feedforward_net_iii.1} parent=11 // pred_check
        %p256 = pneg %p104
      $region22: #{feedforward_net_iii.1} parent=11 // pred_check_branch
        %258 = sbr.rel (%p256) target = $region24
      $region23: #{feedforward_net_iii.1} parent=11 // pred_region
        _
      $region24: #{feedforward_net_iii.1} parent=11 // pred_fallthru
        _
      // Predicated region
      $region25: #{feedforward_net_iii.1} parent=11 // pred_check
        %p259 = pneg %p125
      $region26: #{feedforward_net_iii.1} parent=11 // pred_check_branch
        %261 = sbr.rel (%p259) target = $region28
      $region27: #{feedforward_net_iii.1} parent=11 // pred_region
        _
      $region28: #{feedforward_net_iii.1} parent=11 // pred_fallthru
        _
      // Predicated region
      $region29: #{feedforward_net_iii.1} parent=11 // pred_check
        %p262 = pneg %p146
      $region30: #{feedforward_net_iii.1} parent=11 // pred_check_branch
        %264 = sbr.rel (%p262) target = $region32
      $region31: #{feedforward_net_iii.1} parent=11 // pred_region
        _
      $region32: #{feedforward_net_iii.1} parent=11 // pred_fallthru
        _
      // Predicated region
      $region33: #{feedforward_net_iii.1} parent=11 // pred_check
        %p265 = pneg %p167
      $region34: #{feedforward_net_iii.1} parent=11 // pred_check_branch
        %267 = sbr.rel (%p265) target = $region36
      $region35: #{feedforward_net_iii.1} parent=11 // pred_region
        _
      $region36: #{feedforward_net_iii.1} parent=11 // pred_fallthru
        _
      // Predicated region
      $region37: #{feedforward_net_iii.1} parent=11 // pred_check
        %p268 = pneg %p188
      $region38: #{feedforward_net_iii.1} parent=11 // pred_check_branch
        %270 = sbr.rel (%p268) target = $region40
      $region39: #{feedforward_net_iii.1} parent=11 // pred_region
        _
      $region40: #{feedforward_net_iii.1} parent=11 // pred_fallthru
        _
      // Predicated region
      $region41: #{feedforward_net_iii.1} parent=11 // pred_check
        %p271 = pneg %p209
      $region42: #{feedforward_net_iii.1} parent=11 // pred_check_branch
        %273 = sbr.rel (%p271) target = $region44
      $region43: #{feedforward_net_iii.1} parent=11 // pred_region
        _
      $region44: #{feedforward_net_iii.1} parent=11 // pred_fallthru
        _
    $region12: #{feedforward_net_iii.1} parent=5 // pred_fallthru
      _
    %p274 = scmp.lt.s32.totalorder %s15, 2
    // Predicated region
    $region45: #{feedforward_net_iii.1} parent=5 // pred_check
      %p275 = pneg %p274
    $region46: #{feedforward_net_iii.1} parent=5 // pred_check_branch
      %277 = sbr.rel (%p275) target = $region48
    $region47: #{feedforward_net_iii.1} parent=5 // pred_region
      // Predicated region
      $region49: #{feedforward_net_iii.1} parent=47 // pred_check
        %p278 = pneg %p35
      $region50: #{feedforward_net_iii.1} parent=47 // pred_check_branch
        %280 = sbr.rel (%p278) target = $region52
      $region51: #{feedforward_net_iii.1} parent=47 // pred_region
        %s281 = smul.u32 32, %s15
        %p282 = scmp.lt.s32.totalorder %s281, 63
        %s283 = scalar_select %p282, %s281, 63
        %s284 = smul.addr %s283, 4
        %s285 = scalar_lea.vmem %s0, %s284
        %s286 = smul.u32 32, %s15
      $region52: #{feedforward_net_iii.1} parent=47 // pred_fallthru
        _
    $region48: #{feedforward_net_iii.1} parent=5 // pred_fallthru
      _
    %p287 = scmp.le.s32.totalorder 1, %s15
    %p288 = scmp.lt.s32.totalorder %s15, 3
    %p289 = pnand %p287, %p288
    %p290 = pneg %p289
    // Predicated region
    $region53: #{feedforward_net_iii.1} parent=5 // pred_check
      _
    $region54: #{feedforward_net_iii.1} parent=5 // pred_check_branch
      %292 = sbr.rel (%p289) target = $region56
    $region55: #{feedforward_net_iii.1} parent=5 // pred_region
      %s293 = ssub.s32 %s15, 1
      %s294 = smul.u32 32, %s20
      %p295 = scmp.lt.s32.totalorder %s294, 63
      %s296 = scalar_select %p295, %s294, 63
      %s297 = smul.addr %s296, 4
      %s298 = scalar_lea.vmem %s0, %s297
      %p299 = pneg %p41
      %p300 = pneg %p38
      %p301 = pneg %p62
      %p302 = pneg %p59
      %p303 = pneg %p83
      %p304 = pneg %p80
      %p305 = pneg %p104
      %p306 = pneg %p101
      %p307 = pneg %p125
      %p308 = pneg %p122
      %p309 = pneg %p146
      %p310 = pneg %p143
      %p311 = pneg %p167
      %p312 = pneg %p164
      %p313 = pneg %p188
      %p314 = pneg %p185
      %p315 = pneg %p209
      %p316 = pneg %p206
      %p317 = pneg %p235
      %p318 = pneg %p232
      %s319 = smul.u32 32, %s20
      %p320 = scmp.lt.s32.totalorder %s319, 63
      %s321 = scalar_select %p320, %s319, 63
      %s322 = smul.addr %s321, 8
      %s323 = scalar_lea.vmem %s9, %s322
      %s324 = smul.u32 32, %s20
      %p325 = scmp.lt.s32.totalorder %s324, 63
      %s326 = scalar_select %p325, %s324, 63
      %s327 = smul.addr %s326, 4
      %s328 = scalar_lea.vmem %s0, %s327
      %s329 = smul.u32 32, %s20
      %s330 = smul.u32 32, %s20
      %p331 = scmp.lt.s32.totalorder %s330, 63
      %s332 = scalar_select %p331, %s330, 63
      %s333 = smul.addr %s332, 8
      %s334 = scalar_lea.vmem %s9, %s333
      %s335 = smul.u32 32, %s20
      %v337 = vld [vmem:[%s328] sm:$0xf]
      %v338 = vld [vmem:[%s328 + $0x4] sm:$0xf]
      %v339 = vld [vmem:[%s328 + $0x8] sm:$0xf]
      %v340 = vld [vmem:[%s328 + $0xc] sm:$0xf]
      %v341 = vld [vmem:[%s328 + $0x10] sm:$0xf]
      %v342 = vld [vmem:[%s328 + $0x14] sm:$0xf]
      %v343 = vld [vmem:[%s328 + $0x18] sm:$0xf]
      %v344 = vld [vmem:[%s328 + $0x1c] sm:$0xf]
      %v345 = vld [vmem:[%s328 + $0x20] sm:$0xf]
      %v346 = vld [vmem:[%s328 + $0x24] sm:$0xf]
      %v347 = vld [vmem:[%s328 + $0x28] sm:$0xf]
      %v348 = vld [vmem:[%s328 + $0x2c] sm:$0xf]
      %v349 = vld [vmem:[%s328 + $0x30] sm:$0xf]
      %v350 = vld [vmem:[%s328 + $0x34] sm:$0xf]
      %v351 = vld [vmem:[%s328 + $0x38] sm:$0xf]
      %v352 = vld [vmem:[%s328 + $0x3c] sm:$0xf]
      %v353 = vld [vmem:[%s328 + $0x40] sm:$0xf]
      %v354 = vld [vmem:[%s328 + $0x44] sm:$0xf]
      %v355 = vld [vmem:[%s328 + $0x48] sm:$0xf]
      %v356 = vld [vmem:[%s328 + $0x4c] sm:$0xf]
      %v357 = vld [vmem:[%s328 + $0x50] sm:$0xf]
      %v358 = vld [vmem:[%s328 + $0x54] sm:$0xf]
      %v359 = vld [vmem:[%s328 + $0x58] sm:$0xf]
      %v360 = vld [vmem:[%s328 + $0x5c] sm:$0xf]
      %v361 = vld [vmem:[%s328 + $0x60] sm:$0xf]
      %v362 = vld [vmem:[%s328 + $0x64] sm:$0xf]
      %v363 = vld [vmem:[%s328 + $0x68] sm:$0xf]
      %v364 = vld [vmem:[%s328 + $0x6c] sm:$0xf]
      %v365 = vld [vmem:[%s328 + $0x70] sm:$0xf]
      %v366 = vld [vmem:[%s328 + $0x74] sm:$0xf]
      %v367 = vld [vmem:[%s328 + $0x78] sm:$0xf]
      %v368 = vld [vmem:[%s328 + $0x7c] sm:$0xf]
      %v369 = vld [vmem:[%s1] sm:$0xf]
      %v370 = vld [vmem:[%s1 + $0x4] sm:$0xf]
      %v371 = vld [vmem:[%s1 + $0x8] sm:$0xf]
      %v372 = vld [vmem:[%s1 + $0xc] sm:$0xf]
      %v373 = vld [vmem:[%s1 + $0x10] sm:$0xf]
      %v374 = vld [vmem:[%s1 + $0x14] sm:$0xf]
      %v375 = vld [vmem:[%s1 + $0x18] sm:$0xf]
      %v376 = vld [vmem:[%s1 + $0x1c] sm:$0xf]
      %v377 = vld [vmem:[%s1 + $0x20] sm:$0xf]
      %v378 = vld [vmem:[%s1 + $0x24] sm:$0xf]
      %v379 = vld [vmem:[%s1 + $0x28] sm:$0xf]
      %v380 = vld [vmem:[%s1 + $0x2c] sm:$0xf]
      %v381 = vld [vmem:[%s1 + $0x30] sm:$0xf]
      %v382 = vld [vmem:[%s1 + $0x34] sm:$0xf]
      %v383 = vld [vmem:[%s1 + $0x38] sm:$0xf]
      %v384 = vld [vmem:[%s1 + $0x3c] sm:$0xf]
      %v385 = vld [vmem:[%s2] sm:$0x1]
      %v387 = vlaneseq
      %v388 = vshrl.u32 %v387, 7
      %v389 = vsub.s32 0, %v388
      %v390 = vrot.slane %v385, %v389
      %v424 = vunpack.c.l.b16 %v337
      %v425 = vunpack.c.l.b16 %v338
      %v426 = vunpack.c.l.b16 %v339
      %v427 = vunpack.c.l.b16 %v340
      %v428 = vunpack.c.l.b16 %v341
      %v429 = vunpack.c.l.b16 %v342
      %v430 = vunpack.c.l.b16 %v343
      %v431 = vunpack.c.l.b16 %v344
      %v432 = vunpack.c.l.b16 %v345
      %v433 = vunpack.c.l.b16 %v346
      %v434 = vunpack.c.l.b16 %v347
      %v435 = vunpack.c.l.b16 %v348
      %v436 = vunpack.c.l.b16 %v349
      %v437 = vunpack.c.l.b16 %v350
      %v438 = vunpack.c.l.b16 %v351
      %v439 = vunpack.c.l.b16 %v352
      %v440 = vunpack.c.l.b16 %v353
      %v441 = vunpack.c.l.b16 %v354
      %v442 = vunpack.c.l.b16 %v355
      %v443 = vunpack.c.l.b16 %v356
      %v444 = vunpack.c.l.b16 %v357
      %v445 = vunpack.c.l.b16 %v358
      %v446 = vunpack.c.l.b16 %v359
      %v447 = vunpack.c.l.b16 %v360
      %v448 = vunpack.c.l.b16 %v361
      %v449 = vunpack.c.l.b16 %v362
      %v450 = vunpack.c.l.b16 %v363
      %v451 = vunpack.c.l.b16 %v364
      %v452 = vunpack.c.l.b16 %v365
      %v453 = vunpack.c.l.b16 %v366
      %v454 = vunpack.c.l.b16 %v367
      %v455 = vunpack.c.l.b16 %v368
      %v456 = vpack.c.b16 %v425, %v424
      %v457 = vpack.c.b16 %v427, %v426
      %v458 = vpack.c.b16 %v429, %v428
      %v459 = vpack.c.b16 %v431, %v430
      %v460 = vpack.c.b16 %v433, %v432
      %v461 = vpack.c.b16 %v435, %v434
      %v462 = vpack.c.b16 %v437, %v436
      %v463 = vpack.c.b16 %v439, %v438
      %v464 = vpack.c.b16 %v441, %v440
      %v465 = vpack.c.b16 %v443, %v442
      %v466 = vpack.c.b16 %v445, %v444
      %v467 = vpack.c.b16 %v447, %v446
      %v468 = vpack.c.b16 %v449, %v448
      %v469 = vpack.c.b16 %v451, %v450
      %v470 = vpack.c.b16 %v453, %v452
      %v471 = vpack.c.b16 %v455, %v454
      %v504 = vunpack.c.l.b16 %v369
      %v505 = vunpack.c.l.b16 %v370
      %v506 = vunpack.c.l.b16 %v371
      %v507 = vunpack.c.l.b16 %v372
      %v508 = vunpack.c.l.b16 %v373
      %v509 = vunpack.c.l.b16 %v374
      %v510 = vunpack.c.l.b16 %v375
      %v511 = vunpack.c.l.b16 %v376
      %v512 = vunpack.c.l.b16 %v377
      %v513 = vunpack.c.l.b16 %v378
      %v514 = vunpack.c.l.b16 %v379
      %v515 = vunpack.c.l.b16 %v380
      %v516 = vunpack.c.l.b16 %v381
      %v517 = vunpack.c.l.b16 %v382
      %v518 = vunpack.c.l.b16 %v383
      %v519 = vunpack.c.l.b16 %v384
      %v520 = vpack.c.b16 %v505, %v504
      %v521 = vpack.c.b16 %v507, %v506
      %v522 = vpack.c.b16 %v509, %v508
      %v523 = vpack.c.b16 %v511, %v510
      %v524 = vpack.c.b16 %v513, %v512
      %v525 = vpack.c.b16 %v515, %v514
      %v526 = vpack.c.b16 %v517, %v516
      %v527 = vpack.c.b16 %v519, %v518
      %536 = vmatprep.subr.bf16.mxu0 0
      %537 = vmatpush1.bf16.msra.mxu0 %v527
      %538 = vmatprep.subr.bf16.mxu0 0
      %539 = vmatpush1.bf16.msra.mxu0 %v526
      %540 = vmatprep.subr.bf16.mxu0 0
      %541 = vmatpush1.bf16.msra.mxu0 %v525
      %542 = vmatprep.subr.bf16.mxu0 0
      %543 = vmatpush1.bf16.msra.mxu0 %v524
      %544 = vmatprep.subr.bf16.mxu0 0
      %545 = vmatpush1.bf16.msra.mxu0 %v523
      %546 = vmatprep.subr.bf16.mxu0 0
      %547 = vmatpush1.bf16.msra.mxu0 %v522
      %548 = vmatprep.subr.bf16.mxu0 0
      %549 = vmatpush1.bf16.msra.mxu0 %v521
      %550 = vmatprep.subr.bf16.mxu0 0
      %551 = vmatpush1.bf16.msra.mxu0 %v520
      %552 = vmatprep.subr.bf16.mxu0 0
      %553 = vmatpush2.bf16.msra.mxu0 0
      %554 = vmatprep.subr.bf16.mxu0 0
      %555 = vmatpush2.bf16.msra.mxu0 0
      %556 = vmatprep.subr.bf16.mxu0 0
      %557 = vmatpush2.bf16.msra.mxu0 0
      %558 = vmatprep.subr.bf16.mxu0 0
      %559 = vmatpush2.bf16.msra.mxu0 0
      %560 = vmatprep.subr.bf16.mxu0 0
      %561 = vmatpush2.bf16.msra.mxu0 0
      %562 = vmatprep.subr.bf16.mxu0 0
      %563 = vmatpush2.bf16.msra.mxu0 0
      %564 = vmatprep.subr.bf16.mxu0 0
      %565 = vmatpush2.bf16.msra.mxu0 0
      %566 = vmatprep.subr.bf16.mxu0 0
      %567 = vmatpush2.bf16.msra.mxu0 0
      %568 = vmatprep.mubr.bf16.mxu0 0
      %569 = vmatmul.mubr.bf16.gmra.mxu0 %v456
      %v570 = vpop.f32.mrf.mxu0
      %v571 = vadd.f32 %v390, %v570
      %v572 = vpop.f32.mrf.mxu0
      %v573 = vpop.f32.mrf.mxu0
      %v574 = vadd.f32 %v390, %v573
      %v575 = vpop.f32.mrf.mxu0
      %576 = vmatprep.mubr.bf16.mxu0 0
      %577 = vmatmul.mubr.bf16.gmra.mxu0 %v457
      %v578 = vpop.f32.mrf.mxu0
      %v579 = vadd.f32 %v390, %v578
      %v580 = vpop.f32.mrf.mxu0
      %v581 = vpop.f32.mrf.mxu0
      %v582 = vadd.f32 %v390, %v581
      %v583 = vpop.f32.mrf.mxu0
      %584 = vmatprep.mubr.bf16.mxu0 0
      %585 = vmatmul.mubr.bf16.gmra.mxu0 %v458
      %v586 = vpop.f32.mrf.mxu0
      %v587 = vadd.f32 %v390, %v586
      %v588 = vpop.f32.mrf.mxu0
      %v589 = vpop.f32.mrf.mxu0
      %v590 = vadd.f32 %v390, %v589
      %v591 = vpop.f32.mrf.mxu0
      %592 = vmatprep.mubr.bf16.mxu0 0
      %593 = vmatmul.mubr.bf16.gmra.mxu0 %v459
      %v594 = vpop.f32.mrf.mxu0
      %v595 = vadd.f32 %v390, %v594
      %v596 = vpop.f32.mrf.mxu0
      %v597 = vpop.f32.mrf.mxu0
      %v598 = vadd.f32 %v390, %v597
      %v599 = vpop.f32.mrf.mxu0
      %600 = vmatprep.mubr.bf16.mxu0 0
      %601 = vmatmul.mubr.bf16.gmra.mxu0 %v460
      %v602 = vpop.f32.mrf.mxu0
      %v603 = vadd.f32 %v390, %v602
      %v604 = vpop.f32.mrf.mxu0
      %v605 = vpop.f32.mrf.mxu0
      %v606 = vadd.f32 %v390, %v605
      %v607 = vpop.f32.mrf.mxu0
      %608 = vmatprep.mubr.bf16.mxu0 0
      %609 = vmatmul.mubr.bf16.gmra.mxu0 %v461
      %v610 = vpop.f32.mrf.mxu0
      %v611 = vadd.f32 %v390, %v610
      %v612 = vpop.f32.mrf.mxu0
      %v613 = vpop.f32.mrf.mxu0
      %v614 = vadd.f32 %v390, %v613
      %v615 = vpop.f32.mrf.mxu0
      %616 = vmatprep.mubr.bf16.mxu0 0
      %617 = vmatmul.mubr.bf16.gmra.mxu0 %v462
      %v618 = vpop.f32.mrf.mxu0
      %v619 = vadd.f32 %v390, %v618
      %v620 = vpop.f32.mrf.mxu0
      %v621 = vpop.f32.mrf.mxu0
      %v622 = vadd.f32 %v390, %v621
      %v623 = vpop.f32.mrf.mxu0
      %624 = vmatprep.mubr.bf16.mxu0 0
      %625 = vmatmul.mubr.bf16.gmra.mxu0 %v463
      %v626 = vpop.f32.mrf.mxu0
      %v627 = vadd.f32 %v390, %v626
      %v628 = vpop.f32.mrf.mxu0
      %v629 = vpop.f32.mrf.mxu0
      %v630 = vadd.f32 %v390, %v629
      %v631 = vpop.f32.mrf.mxu0
      %632 = vmatprep.mubr.bf16.mxu0 0
      %633 = vmatmul.mubr.bf16.gmra.mxu0 %v464
      %v634 = vpop.f32.mrf.mxu0
      %v635 = vadd.f32 %v390, %v634
      %v636 = vpop.f32.mrf.mxu0
      %v637 = vpop.f32.mrf.mxu0
      %v638 = vadd.f32 %v390, %v637
      %v639 = vpop.f32.mrf.mxu0
      %640 = vmatprep.mubr.bf16.mxu0 0
      %641 = vmatmul.mubr.bf16.gmra.mxu0 %v465
      %v642 = vpop.f32.mrf.mxu0
      %v643 = vadd.f32 %v390, %v642
      %v644 = vpop.f32.mrf.mxu0
      %v645 = vpop.f32.mrf.mxu0
      %v646 = vadd.f32 %v390, %v645
      %v647 = vpop.f32.mrf.mxu0
      %648 = vmatprep.mubr.bf16.mxu0 0
      %649 = vmatmul.mubr.bf16.gmra.mxu0 %v466
      %v650 = vpop.f32.mrf.mxu0
      %v651 = vadd.f32 %v390, %v650
      %v652 = vpop.f32.mrf.mxu0
      %v653 = vpop.f32.mrf.mxu0
      %v654 = vadd.f32 %v390, %v653
      %v655 = vpop.f32.mrf.mxu0
      %656 = vmatprep.mubr.bf16.mxu0 0
      %657 = vmatmul.mubr.bf16.gmra.mxu0 %v467
      %v658 = vpop.f32.mrf.mxu0
      %v659 = vadd.f32 %v390, %v658
      %v660 = vpop.f32.mrf.mxu0
      %v661 = vpop.f32.mrf.mxu0
      %v662 = vadd.f32 %v390, %v661
      %v663 = vpop.f32.mrf.mxu0
      %664 = vmatprep.mubr.bf16.mxu0 0
      %665 = vmatmul.mubr.bf16.gmra.mxu0 %v468
      %v666 = vpop.f32.mrf.mxu0
      %v667 = vadd.f32 %v390, %v666
      %v668 = vpop.f32.mrf.mxu0
      %v669 = vpop.f32.mrf.mxu0
      %v670 = vadd.f32 %v390, %v669
      %v671 = vpop.f32.mrf.mxu0
      %672 = vmatprep.mubr.bf16.mxu0 0
      %673 = vmatmul.mubr.bf16.gmra.mxu0 %v469
      %v674 = vpop.f32.mrf.mxu0
      %v675 = vadd.f32 %v390, %v674
      %v676 = vpop.f32.mrf.mxu0
      %v677 = vpop.f32.mrf.mxu0
      %v678 = vadd.f32 %v390, %v677
      %v679 = vpop.f32.mrf.mxu0
      %680 = vmatprep.mubr.bf16.mxu0 0
      %681 = vmatmul.mubr.bf16.gmra.mxu0 %v470
      %v682 = vpop.f32.mrf.mxu0
      %v683 = vadd.f32 %v390, %v682
      %v684 = vpop.f32.mrf.mxu0
      %v685 = vpop.f32.mrf.mxu0
      %v686 = vadd.f32 %v390, %v685
      %v687 = vpop.f32.mrf.mxu0
      %688 = vmatprep.mubr.bf16.mxu0 0
      %689 = vmatmul.mubr.bf16.gmra.mxu0 %v471
      %v690 = vpop.f32.mrf.mxu0
      %v691 = vadd.f32 %v390, %v690
      %v692 = vpop.f32.mrf.mxu0
      %v693 = vpop.f32.mrf.mxu0
      %v694 = vadd.f32 %v390, %v693
      %v695 = vpop.f32.mrf.mxu0
      %696 = vdwg.mxu0
      %697 = vst [vmem:[#allocation2] sm:$0xff] %v571
      %698 = vst [vmem:[#allocation2 + $0x8] sm:$0xff] %v574
      %699 = vst [vmem:[#allocation2 + $0x10] sm:$0xff] %v579
      %700 = vst [vmem:[#allocation2 + $0x18] sm:$0xff] %v582
      %701 = vst [vmem:[#allocation2 + $0x20] sm:$0xff] %v587
      %702 = vst [vmem:[#allocation2 + $0x28] sm:$0xff] %v590
      %703 = vst [vmem:[#allocation2 + $0x30] sm:$0xff] %v595
      %704 = vst [vmem:[#allocation2 + $0x38] sm:$0xff] %v598
      %705 = vst [vmem:[#allocation2 + $0x40] sm:$0xff] %v603
      %706 = vst [vmem:[#allocation2 + $0x48] sm:$0xff] %v606
      %707 = vst [vmem:[#allocation2 + $0x50] sm:$0xff] %v611
      %708 = vst [vmem:[#allocation2 + $0x58] sm:$0xff] %v614
      %709 = vst [vmem:[#allocation2 + $0x60] sm:$0xff] %v619
      %710 = vst [vmem:[#allocation2 + $0x68] sm:$0xff] %v622
      %711 = vst [vmem:[#allocation2 + $0x70] sm:$0xff] %v627
      %712 = vst [vmem:[#allocation2 + $0x78] sm:$0xff] %v630
      %713 = vst [vmem:[#allocation2 + $0x80] sm:$0xff] %v635
      %714 = vst [vmem:[#allocation2 + $0x88] sm:$0xff] %v638
      %715 = vst [vmem:[#allocation2 + $0x90] sm:$0xff] %v643
      %716 = vst [vmem:[#allocation2 + $0x98] sm:$0xff] %v646
      %717 = vst [vmem:[#allocation2 + $0xa0] sm:$0xff] %v651
      %718 = vst [vmem:[#allocation2 + $0xa8] sm:$0xff] %v654
      %719 = vst [vmem:[#allocation2 + $0xb0] sm:$0xff] %v659
      %720 = vst [vmem:[#allocation2 + $0xb8] sm:$0xff] %v662
      %721 = vst [vmem:[#allocation2 + $0xc0] sm:$0xff] %v667
      %722 = vst [vmem:[#allocation2 + $0xc8] sm:$0xff] %v670
      %723 = vst [vmem:[#allocation2 + $0xd0] sm:$0xff] %v675
      %724 = vst [vmem:[#allocation2 + $0xd8] sm:$0xff] %v678
      %725 = vst [vmem:[#allocation2 + $0xe0] sm:$0xff] %v683
      %726 = vst [vmem:[#allocation2 + $0xe8] sm:$0xff] %v686
      %727 = vst [vmem:[#allocation2 + $0xf0] sm:$0xff] %v691
      %728 = vst [vmem:[#allocation2 + $0xf8] sm:$0xff] %v694
      %729 = vst [vmem:[#allocation3] sm:$0xff] %v571
      %730 = vst [vmem:[#allocation3 + $0x8] sm:$0xff] %v574
      %731 = vst [vmem:[#allocation3 + $0x10] sm:$0xff] %v579
      %732 = vst [vmem:[#allocation3 + $0x18] sm:$0xff] %v582
      %733 = vst [vmem:[#allocation3 + $0x20] sm:$0xff] %v587
      %734 = vst [vmem:[#allocation3 + $0x28] sm:$0xff] %v590
      %735 = vst [vmem:[#allocation3 + $0x30] sm:$0xff] %v595
      %736 = vst [vmem:[#allocation3 + $0x38] sm:$0xff] %v598
      %737 = vst [vmem:[#allocation3 + $0x40] sm:$0xff] %v603
      %738 = vst [vmem:[#allocation3 + $0x48] sm:$0xff] %v606
      %739 = vst [vmem:[#allocation3 + $0x50] sm:$0xff] %v611
      %740 = vst [vmem:[#allocation3 + $0x58] sm:$0xff] %v614
      %741 = vst [vmem:[#allocation3 + $0x60] sm:$0xff] %v619
      %742 = vst [vmem:[#allocation3 + $0x68] sm:$0xff] %v622
      %743 = vst [vmem:[#allocation3 + $0x70] sm:$0xff] %v627
      %744 = vst [vmem:[#allocation3 + $0x78] sm:$0xff] %v630
      %745 = vst [vmem:[#allocation3 + $0x80] sm:$0xff] %v635
      %746 = vst [vmem:[#allocation3 + $0x88] sm:$0xff] %v638
      %747 = vst [vmem:[#allocation3 + $0x90] sm:$0xff] %v643
      %748 = vst [vmem:[#allocation3 + $0x98] sm:$0xff] %v646
      %749 = vst [vmem:[#allocation3 + $0xa0] sm:$0xff] %v651
      %750 = vst [vmem:[#allocation3 + $0xa8] sm:$0xff] %v654
      %751 = vst [vmem:[#allocation3 + $0xb0] sm:$0xff] %v659
      %752 = vst [vmem:[#allocation3 + $0xb8] sm:$0xff] %v662
      %753 = vst [vmem:[#allocation3 + $0xc0] sm:$0xff] %v667
      %754 = vst [vmem:[#allocation3 + $0xc8] sm:$0xff] %v670
      %755 = vst [vmem:[#allocation3 + $0xd0] sm:$0xff] %v675
      %756 = vst [vmem:[#allocation3 + $0xd8] sm:$0xff] %v678
      %757 = vst [vmem:[#allocation3 + $0xe0] sm:$0xff] %v683
      %758 = vst [vmem:[#allocation3 + $0xe8] sm:$0xff] %v686
      %759 = vst [vmem:[#allocation3 + $0xf0] sm:$0xff] %v691
      %760 = vst [vmem:[#allocation3 + $0xf8] sm:$0xff] %v694
      %v761 = vld [vmem:[#allocation3] sm:$0xff]
      %v762 = vld [vmem:[#allocation3 + $0x8] sm:$0xff]
      %v763 = vld [vmem:[#allocation3 + $0x10] sm:$0xff]
      %v764 = vld [vmem:[#allocation3 + $0x18] sm:$0xff]
      %v765 = vld [vmem:[#allocation3 + $0x20] sm:$0xff]
      %v766 = vld [vmem:[#allocation3 + $0x28] sm:$0xff]
      %v767 = vld [vmem:[#allocation3 + $0x30] sm:$0xff]
      %v768 = vld [vmem:[#allocation3 + $0x38] sm:$0xff]
      %v769 = vld [vmem:[#allocation3 + $0x40] sm:$0xff]
      %v770 = vld [vmem:[#allocation3 + $0x48] sm:$0xff]
      %v771 = vld [vmem:[#allocation3 + $0x50] sm:$0xff]
      %v772 = vld [vmem:[#allocation3 + $0x58] sm:$0xff]
      %v773 = vld [vmem:[#allocation3 + $0x60] sm:$0xff]
      %v774 = vld [vmem:[#allocation3 + $0x68] sm:$0xff]
      %v775 = vld [vmem:[#allocation3 + $0x70] sm:$0xff]
      %v776 = vld [vmem:[#allocation3 + $0x78] sm:$0xff]
      %v777 = vld [vmem:[#allocation3 + $0x80] sm:$0xff]
      %v778 = vld [vmem:[#allocation3 + $0x88] sm:$0xff]
      %v779 = vld [vmem:[#allocation3 + $0x90] sm:$0xff]
      %v780 = vld [vmem:[#allocation3 + $0x98] sm:$0xff]
      %v781 = vld [vmem:[#allocation3 + $0xa0] sm:$0xff]
      %v782 = vld [vmem:[#allocation3 + $0xa8] sm:$0xff]
      %v783 = vld [vmem:[#allocation3 + $0xb0] sm:$0xff]
      %v784 = vld [vmem:[#allocation3 + $0xb8] sm:$0xff]
      %v785 = vld [vmem:[#allocation3 + $0xc0] sm:$0xff]
      %v786 = vld [vmem:[#allocation3 + $0xc8] sm:$0xff]
      %v787 = vld [vmem:[#allocation3 + $0xd0] sm:$0xff]
      %v788 = vld [vmem:[#allocation3 + $0xd8] sm:$0xff]
      %v789 = vld [vmem:[#allocation3 + $0xe0] sm:$0xff]
      %v790 = vld [vmem:[#allocation3 + $0xe8] sm:$0xff]
      %v791 = vld [vmem:[#allocation3 + $0xf0] sm:$0xff]
      %v792 = vld [vmem:[#allocation3 + $0xf8] sm:$0xff]
      %vm793 = vcmp.gt.f32.partialorder %v761, 0.0
      %vm794 = vcmp.gt.f32.partialorder %v762, 0.0
      %vm795 = vcmp.gt.f32.partialorder %v763, 0.0
      %vm796 = vcmp.gt.f32.partialorder %v764, 0.0
      %vm797 = vcmp.gt.f32.partialorder %v765, 0.0
      %vm798 = vcmp.gt.f32.partialorder %v766, 0.0
      %vm799 = vcmp.gt.f32.partialorder %v767, 0.0
      %vm800 = vcmp.gt.f32.partialorder %v768, 0.0
      %vm801 = vcmp.gt.f32.partialorder %v769, 0.0
      %vm802 = vcmp.gt.f32.partialorder %v770, 0.0
      %vm803 = vcmp.gt.f32.partialorder %v771, 0.0
      %vm804 = vcmp.gt.f32.partialorder %v772, 0.0
      %vm805 = vcmp.gt.f32.partialorder %v773, 0.0
      %vm806 = vcmp.gt.f32.partialorder %v774, 0.0
      %vm807 = vcmp.gt.f32.partialorder %v775, 0.0
      %vm808 = vcmp.gt.f32.partialorder %v776, 0.0
      %vm809 = vcmp.gt.f32.partialorder %v777, 0.0
      %vm810 = vcmp.gt.f32.partialorder %v778, 0.0
      %vm811 = vcmp.gt.f32.partialorder %v779, 0.0
      %vm812 = vcmp.gt.f32.partialorder %v780, 0.0
      %vm813 = vcmp.gt.f32.partialorder %v781, 0.0
      %vm814 = vcmp.gt.f32.partialorder %v782, 0.0
      %vm815 = vcmp.gt.f32.partialorder %v783, 0.0
      %vm816 = vcmp.gt.f32.partialorder %v784, 0.0
      %vm817 = vcmp.gt.f32.partialorder %v785, 0.0
      %vm818 = vcmp.gt.f32.partialorder %v786, 0.0
      %vm819 = vcmp.gt.f32.partialorder %v787, 0.0
      %vm820 = vcmp.gt.f32.partialorder %v788, 0.0
      %vm821 = vcmp.gt.f32.partialorder %v789, 0.0
      %vm822 = vcmp.gt.f32.partialorder %v790, 0.0
      %vm823 = vcmp.gt.f32.partialorder %v791, 0.0
      %vm824 = vcmp.gt.f32.partialorder %v792, 0.0
      %v825 = vmul.f32 %v761, 0.25
      %v826 = vmul.f32 %v762, 0.25
      %v827 = vmul.f32 %v763, 0.25
      %v828 = vmul.f32 %v764, 0.25
      %v829 = vmul.f32 %v765, 0.25
      %v830 = vmul.f32 %v766, 0.25
      %v831 = vmul.f32 %v767, 0.25
      %v832 = vmul.f32 %v768, 0.25
      %v833 = vmul.f32 %v769, 0.25
      %v834 = vmul.f32 %v770, 0.25
      %v835 = vmul.f32 %v771, 0.25
      %v836 = vmul.f32 %v772, 0.25
      %v837 = vmul.f32 %v773, 0.25
      %v838 = vmul.f32 %v774, 0.25
      %v839 = vmul.f32 %v775, 0.25
      %v840 = vmul.f32 %v776, 0.25
      %v841 = vmul.f32 %v777, 0.25
      %v842 = vmul.f32 %v778, 0.25
      %v843 = vmul.f32 %v779, 0.25
      %v844 = vmul.f32 %v780, 0.25
      %v845 = vmul.f32 %v781, 0.25
      %v846 = vmul.f32 %v782, 0.25
      %v847 = vmul.f32 %v783, 0.25
      %v848 = vmul.f32 %v784, 0.25
      %v849 = vmul.f32 %v785, 0.25
      %v850 = vmul.f32 %v786, 0.25
      %v851 = vmul.f32 %v787, 0.25
      %v852 = vmul.f32 %v788, 0.25
      %v853 = vmul.f32 %v789, 0.25
      %v854 = vmul.f32 %v790, 0.25
      %v855 = vmul.f32 %v791, 0.25
      %v856 = vmul.f32 %v792, 0.25
      %v857 = vsel %vm793, %v761, %v825
      %v858 = vsel %vm794, %v762, %v826
      %v859 = vsel %vm795, %v763, %v827
      %v860 = vsel %vm796, %v764, %v828
      %v861 = vsel %vm797, %v765, %v829
      %v862 = vsel %vm798, %v766, %v830
      %v863 = vsel %vm799, %v767, %v831
      %v864 = vsel %vm800, %v768, %v832
      %v865 = vsel %vm801, %v769, %v833
      %v866 = vsel %vm802, %v770, %v834
      %v867 = vsel %vm803, %v771, %v835
      %v868 = vsel %vm804, %v772, %v836
      %v869 = vsel %vm805, %v773, %v837
      %v870 = vsel %vm806, %v774, %v838
      %v871 = vsel %vm807, %v775, %v839
      %v872 = vsel %vm808, %v776, %v840
      %v873 = vsel %vm809, %v777, %v841
      %v874 = vsel %vm810, %v778, %v842
      %v875 = vsel %vm811, %v779, %v843
      %v876 = vsel %vm812, %v780, %v844
      %v877 = vsel %vm813, %v781, %v845
      %v878 = vsel %vm814, %v782, %v846
      %v879 = vsel %vm815, %v783, %v847
      %v880 = vsel %vm816, %v784, %v848
      %v881 = vsel %vm817, %v785, %v849
      %v882 = vsel %vm818, %v786, %v850
      %v883 = vsel %vm819, %v787, %v851
      %v884 = vsel %vm820, %v788, %v852
      %v885 = vsel %vm821, %v789, %v853
      %v886 = vsel %vm822, %v790, %v854
      %v887 = vsel %vm823, %v791, %v855
      %v888 = vsel %vm824, %v792, %v856
      %v889 = vld [vmem:[#allocation2] sm:$0xff]
      %v890 = vld [vmem:[#allocation2 + $0x8] sm:$0xff]
      %v891 = vld [vmem:[#allocation2 + $0x10] sm:$0xff]
      %v892 = vld [vmem:[#allocation2 + $0x18] sm:$0xff]
      %v893 = vld [vmem:[#allocation2 + $0x20] sm:$0xff]
      %v894 = vld [vmem:[#allocation2 + $0x28] sm:$0xff]
      %v895 = vld [vmem:[#allocation2 + $0x30] sm:$0xff]
      %v896 = vld [vmem:[#allocation2 + $0x38] sm:$0xff]
      %v897 = vld [vmem:[#allocation2 + $0x40] sm:$0xff]
      %v898 = vld [vmem:[#allocation2 + $0x48] sm:$0xff]
      %v899 = vld [vmem:[#allocation2 + $0x50] sm:$0xff]
      %v900 = vld [vmem:[#allocation2 + $0x58] sm:$0xff]
      %v901 = vld [vmem:[#allocation2 + $0x60] sm:$0xff]
      %v902 = vld [vmem:[#allocation2 + $0x68] sm:$0xff]
      %v903 = vld [vmem:[#allocation2 + $0x70] sm:$0xff]
      %v904 = vld [vmem:[#allocation2 + $0x78] sm:$0xff]
      %v905 = vld [vmem:[#allocation2 + $0x80] sm:$0xff]
      %v906 = vld [vmem:[#allocation2 + $0x88] sm:$0xff]
      %v907 = vld [vmem:[#allocation2 + $0x90] sm:$0xff]
      %v908 = vld [vmem:[#allocation2 + $0x98] sm:$0xff]
      %v909 = vld [vmem:[#allocation2 + $0xa0] sm:$0xff]
      %v910 = vld [vmem:[#allocation2 + $0xa8] sm:$0xff]
      %v911 = vld [vmem:[#allocation2 + $0xb0] sm:$0xff]
      %v912 = vld [vmem:[#allocation2 + $0xb8] sm:$0xff]
      %v913 = vld [vmem:[#allocation2 + $0xc0] sm:$0xff]
      %v914 = vld [vmem:[#allocation2 + $0xc8] sm:$0xff]
      %v915 = vld [vmem:[#allocation2 + $0xd0] sm:$0xff]
      %v916 = vld [vmem:[#allocation2 + $0xd8] sm:$0xff]
      %v917 = vld [vmem:[#allocation2 + $0xe0] sm:$0xff]
      %v918 = vld [vmem:[#allocation2 + $0xe8] sm:$0xff]
      %v919 = vld [vmem:[#allocation2 + $0xf0] sm:$0xff]
      %v920 = vld [vmem:[#allocation2 + $0xf8] sm:$0xff]
      %v921 = vadd.f32 %v857, %v889
      %v922 = vadd.f32 %v858, %v890
      %v923 = vadd.f32 %v859, %v891
      %v924 = vadd.f32 %v860, %v892
      %v925 = vadd.f32 %v861, %v893
      %v926 = vadd.f32 %v862, %v894
      %v927 = vadd.f32 %v863, %v895
      %v928 = vadd.f32 %v864, %v896
      %v929 = vadd.f32 %v865, %v897
      %v930 = vadd.f32 %v866, %v898
      %v931 = vadd.f32 %v867, %v899
      %v932 = vadd.f32 %v868, %v900
      %v933 = vadd.f32 %v869, %v901
      %v934 = vadd.f32 %v870, %v902
      %v935 = vadd.f32 %v871, %v903
      %v936 = vadd.f32 %v872, %v904
      %v937 = vadd.f32 %v873, %v905
      %v938 = vadd.f32 %v874, %v906
      %v939 = vadd.f32 %v875, %v907
      %v940 = vadd.f32 %v876, %v908
      %v941 = vadd.f32 %v877, %v909
      %v942 = vadd.f32 %v878, %v910
      %v943 = vadd.f32 %v879, %v911
      %v944 = vadd.f32 %v880, %v912
      %v945 = vadd.f32 %v881, %v913
      %v946 = vadd.f32 %v882, %v914
      %v947 = vadd.f32 %v883, %v915
      %v948 = vadd.f32 %v884, %v916
      %v949 = vadd.f32 %v885, %v917
      %v950 = vadd.f32 %v886, %v918
      %v951 = vadd.f32 %v887, %v919
      %v952 = vadd.f32 %v888, %v920
      %v953 = vpack.c.bf16 %v922, %v921
      %v954 = vpack.c.bf16 %v924, %v923
      %v955 = vpack.c.bf16 %v926, %v925
      %v956 = vpack.c.bf16 %v928, %v927
      %v957 = vpack.c.bf16 %v930, %v929
      %v958 = vpack.c.bf16 %v932, %v931
      %v959 = vpack.c.bf16 %v934, %v933
      %v960 = vpack.c.bf16 %v936, %v935
      %v961 = vpack.c.bf16 %v938, %v937
      %v962 = vpack.c.bf16 %v940, %v939
      %v963 = vpack.c.bf16 %v942, %v941
      %v964 = vpack.c.bf16 %v944, %v943
      %v965 = vpack.c.bf16 %v946, %v945
      %v966 = vpack.c.bf16 %v948, %v947
      %v967 = vpack.c.bf16 %v950, %v949
      %v968 = vpack.c.bf16 %v952, %v951
      %v969 = vld [vmem:[%s3] sm:$0xf]
      %v970 = vld [vmem:[%s3 + $0x4] sm:$0xf]
      %v971 = vld [vmem:[%s3 + $0x8] sm:$0xf]
      %v972 = vld [vmem:[%s3 + $0xc] sm:$0xf]
      %v973 = vld [vmem:[%s3 + $0x10] sm:$0xf]
      %v974 = vld [vmem:[%s3 + $0x14] sm:$0xf]
      %v975 = vld [vmem:[%s3 + $0x18] sm:$0xf]
      %v976 = vld [vmem:[%s3 + $0x1c] sm:$0xf]
      %v977 = vld [vmem:[%s3 + $0x20] sm:$0xf]
      %v978 = vld [vmem:[%s3 + $0x24] sm:$0xf]
      %v979 = vld [vmem:[%s3 + $0x28] sm:$0xf]
      %v980 = vld [vmem:[%s3 + $0x2c] sm:$0xf]
      %v981 = vld [vmem:[%s3 + $0x30] sm:$0xf]
      %v982 = vld [vmem:[%s3 + $0x34] sm:$0xf]
      %v983 = vld [vmem:[%s3 + $0x38] sm:$0xf]
      %v984 = vld [vmem:[%s3 + $0x3c] sm:$0xf]
      %v985 = vld [vmem:[%s4] sm:$0x1]
      %v987 = vlaneseq
      %v988 = vshrl.u32 %v987, 7
      %v989 = vsub.s32 0, %v988
      %v990 = vrot.slane %v985, %v989
      %v1008 = vunpack.c.l.b16 %v969
      %v1009 = vunpack.c.l.b16 %v970
      %v1010 = vunpack.c.l.b16 %v971
      %v1011 = vunpack.c.l.b16 %v972
      %v1012 = vunpack.c.l.b16 %v973
      %v1013 = vunpack.c.l.b16 %v974
      %v1014 = vunpack.c.l.b16 %v975
      %v1015 = vunpack.c.l.b16 %v976
      %v1016 = vunpack.c.l.b16 %v977
      %v1017 = vunpack.c.l.b16 %v978
      %v1018 = vunpack.c.l.b16 %v979
      %v1019 = vunpack.c.l.b16 %v980
      %v1020 = vunpack.c.l.b16 %v981
      %v1021 = vunpack.c.l.b16 %v982
      %v1022 = vunpack.c.l.b16 %v983
      %v1023 = vunpack.c.l.b16 %v984
      %v1024 = vpack.c.b16 %v1009, %v1008
      %v1025 = vpack.c.b16 %v1011, %v1010
      %v1026 = vpack.c.b16 %v1013, %v1012
      %v1027 = vpack.c.b16 %v1015, %v1014
      %v1028 = vpack.c.b16 %v1017, %v1016
      %v1029 = vpack.c.b16 %v1019, %v1018
      %v1030 = vpack.c.b16 %v1021, %v1020
      %v1031 = vpack.c.b16 %v1023, %v1022
      %1040 = vmatprep.subr.bf16.mxu0 0
      %1041 = vmatpush1.bf16.msra.mxu0 %v1031
      %1042 = vmatprep.subr.bf16.mxu0 0
      %1043 = vmatpush1.bf16.msra.mxu0 %v1030
      %1044 = vmatprep.subr.bf16.mxu0 0
      %1045 = vmatpush1.bf16.msra.mxu0 %v1029
      %1046 = vmatprep.subr.bf16.mxu0 0
      %1047 = vmatpush1.bf16.msra.mxu0 %v1028
      %1048 = vmatprep.subr.bf16.mxu0 0
      %1049 = vmatpush1.bf16.msra.mxu0 %v1027
      %1050 = vmatprep.subr.bf16.mxu0 0
      %1051 = vmatpush1.bf16.msra.mxu0 %v1026
      %1052 = vmatprep.subr.bf16.mxu0 0
      %1053 = vmatpush1.bf16.msra.mxu0 %v1025
      %1054 = vmatprep.subr.bf16.mxu0 0
      %1055 = vmatpush1.bf16.msra.mxu0 %v1024
      %1056 = vmatprep.subr.bf16.mxu0 0
      %1057 = vmatpush2.bf16.msra.mxu0 0
      %1058 = vmatprep.subr.bf16.mxu0 0
      %1059 = vmatpush2.bf16.msra.mxu0 0
      %1060 = vmatprep.subr.bf16.mxu0 0
      %1061 = vmatpush2.bf16.msra.mxu0 0
      %1062 = vmatprep.subr.bf16.mxu0 0
      %1063 = vmatpush2.bf16.msra.mxu0 0
      %1064 = vmatprep.subr.bf16.mxu0 0
      %1065 = vmatpush2.bf16.msra.mxu0 0
      %1066 = vmatprep.subr.bf16.mxu0 0
      %1067 = vmatpush2.bf16.msra.mxu0 0
      %1068 = vmatprep.subr.bf16.mxu0 0
      %1069 = vmatpush2.bf16.msra.mxu0 0
      %1070 = vmatprep.subr.bf16.mxu0 0
      %1071 = vmatpush2.bf16.msra.mxu0 0
      %1072 = vmatprep.mubr.bf16.mxu0 0
      %1073 = vmatmul.mubr.bf16.gmra.mxu0 %v953
      %v1074 = vpop.f32.mrf.mxu0
      %v1075 = vadd.f32 %v990, %v1074
      %v1076 = vpop.f32.mrf.mxu0
      %v1077 = vpop.f32.mrf.mxu0
      %v1078 = vadd.f32 %v990, %v1077
      %v1079 = vpop.f32.mrf.mxu0
      %1080 = vmatprep.mubr.bf16.mxu0 0
      %1081 = vmatmul.mubr.bf16.gmra.mxu0 %v954
      %v1082 = vpop.f32.mrf.mxu0
      %v1083 = vadd.f32 %v990, %v1082
      %v1084 = vpop.f32.mrf.mxu0
      %v1085 = vpop.f32.mrf.mxu0
      %v1086 = vadd.f32 %v990, %v1085
      %v1087 = vpop.f32.mrf.mxu0
      %1088 = vmatprep.mubr.bf16.mxu0 0
      %1089 = vmatmul.mubr.bf16.gmra.mxu0 %v955
      %v1090 = vpop.f32.mrf.mxu0
      %v1091 = vadd.f32 %v990, %v1090
      %v1092 = vpop.f32.mrf.mxu0
      %v1093 = vpop.f32.mrf.mxu0
      %v1094 = vadd.f32 %v990, %v1093
      %v1095 = vpop.f32.mrf.mxu0
      %1096 = vmatprep.mubr.bf16.mxu0 0
      %1097 = vmatmul.mubr.bf16.gmra.mxu0 %v956
      %v1098 = vpop.f32.mrf.mxu0
      %v1099 = vadd.f32 %v990, %v1098
      %v1100 = vpop.f32.mrf.mxu0
      %v1101 = vpop.f32.mrf.mxu0
      %v1102 = vadd.f32 %v990, %v1101
      %v1103 = vpop.f32.mrf.mxu0
      %1104 = vmatprep.mubr.bf16.mxu0 0
      %1105 = vmatmul.mubr.bf16.gmra.mxu0 %v957
      %v1106 = vpop.f32.mrf.mxu0
      %v1107 = vadd.f32 %v990, %v1106
      %v1108 = vpop.f32.mrf.mxu0
      %v1109 = vpop.f32.mrf.mxu0
      %v1110 = vadd.f32 %v990, %v1109
      %v1111 = vpop.f32.mrf.mxu0
      %1112 = vmatprep.mubr.bf16.mxu0 0
      %1113 = vmatmul.mubr.bf16.gmra.mxu0 %v958
      %v1114 = vpop.f32.mrf.mxu0
      %v1115 = vadd.f32 %v990, %v1114
      %v1116 = vpop.f32.mrf.mxu0
      %v1117 = vpop.f32.mrf.mxu0
      %v1118 = vadd.f32 %v990, %v1117
      %v1119 = vpop.f32.mrf.mxu0
      %1120 = vmatprep.mubr.bf16.mxu0 0
      %1121 = vmatmul.mubr.bf16.gmra.mxu0 %v959
      %v1122 = vpop.f32.mrf.mxu0
      %v1123 = vadd.f32 %v990, %v1122
      %v1124 = vpop.f32.mrf.mxu0
      %v1125 = vpop.f32.mrf.mxu0
      %v1126 = vadd.f32 %v990, %v1125
      %v1127 = vpop.f32.mrf.mxu0
      %1128 = vmatprep.mubr.bf16.mxu0 0
      %1129 = vmatmul.mubr.bf16.gmra.mxu0 %v960
      %v1130 = vpop.f32.mrf.mxu0
      %v1131 = vadd.f32 %v990, %v1130
      %v1132 = vpop.f32.mrf.mxu0
      %v1133 = vpop.f32.mrf.mxu0
      %v1134 = vadd.f32 %v990, %v1133
      %v1135 = vpop.f32.mrf.mxu0
      %1136 = vmatprep.mubr.bf16.mxu0 0
      %1137 = vmatmul.mubr.bf16.gmra.mxu0 %v961
      %v1138 = vpop.f32.mrf.mxu0
      %v1139 = vadd.f32 %v990, %v1138
      %v1140 = vpop.f32.mrf.mxu0
      %v1141 = vpop.f32.mrf.mxu0
      %v1142 = vadd.f32 %v990, %v1141
      %v1143 = vpop.f32.mrf.mxu0
      %1144 = vmatprep.mubr.bf16.mxu0 0
      %1145 = vmatmul.mubr.bf16.gmra.mxu0 %v962
      %v1146 = vpop.f32.mrf.mxu0
      %v1147 = vadd.f32 %v990, %v1146
      %v1148 = vpop.f32.mrf.mxu0
      %v1149 = vpop.f32.mrf.mxu0
      %v1150 = vadd.f32 %v990, %v1149
      %v1151 = vpop.f32.mrf.mxu0
      %1152 = vmatprep.mubr.bf16.mxu0 0
      %1153 = vmatmul.mubr.bf16.gmra.mxu0 %v963
      %v1154 = vpop.f32.mrf.mxu0
      %v1155 = vadd.f32 %v990, %v1154
      %v1156 = vpop.f32.mrf.mxu0
      %v1157 = vpop.f32.mrf.mxu0
      %v1158 = vadd.f32 %v990, %v1157
      %v1159 = vpop.f32.mrf.mxu0
      %1160 = vmatprep.mubr.bf16.mxu0 0
      %1161 = vmatmul.mubr.bf16.gmra.mxu0 %v964
      %v1162 = vpop.f32.mrf.mxu0
      %v1163 = vadd.f32 %v990, %v1162
      %v1164 = vpop.f32.mrf.mxu0
      %v1165 = vpop.f32.mrf.mxu0
      %v1166 = vadd.f32 %v990, %v1165
      %v1167 = vpop.f32.mrf.mxu0
      %1168 = vmatprep.mubr.bf16.mxu0 0
      %1169 = vmatmul.mubr.bf16.gmra.mxu0 %v965
      %v1170 = vpop.f32.mrf.mxu0
      %v1171 = vadd.f32 %v990, %v1170
      %v1172 = vpop.f32.mrf.mxu0
      %v1173 = vpop.f32.mrf.mxu0
      %v1174 = vadd.f32 %v990, %v1173
      %v1175 = vpop.f32.mrf.mxu0
      %1176 = vmatprep.mubr.bf16.mxu0 0
      %1177 = vmatmul.mubr.bf16.gmra.mxu0 %v966
      %v1178 = vpop.f32.mrf.mxu0
      %v1179 = vadd.f32 %v990, %v1178
      %v1180 = vpop.f32.mrf.mxu0
      %v1181 = vpop.f32.mrf.mxu0
      %v1182 = vadd.f32 %v990, %v1181
      %v1183 = vpop.f32.mrf.mxu0
      %1184 = vmatprep.mubr.bf16.mxu0 0
      %1185 = vmatmul.mubr.bf16.gmra.mxu0 %v967
      %v1186 = vpop.f32.mrf.mxu0
      %v1187 = vadd.f32 %v990, %v1186
      %v1188 = vpop.f32.mrf.mxu0
      %v1189 = vpop.f32.mrf.mxu0
      %v1190 = vadd.f32 %v990, %v1189
      %v1191 = vpop.f32.mrf.mxu0
      %1192 = vmatprep.mubr.bf16.mxu0 0
      %1193 = vmatmul.mubr.bf16.gmra.mxu0 %v968
      %v1194 = vpop.f32.mrf.mxu0
      %v1195 = vadd.f32 %v990, %v1194
      %v1196 = vpop.f32.mrf.mxu0
      %v1197 = vpop.f32.mrf.mxu0
      %v1198 = vadd.f32 %v990, %v1197
      %v1199 = vpop.f32.mrf.mxu0
      %1200 = vdwg.mxu0
      %1201 = vst [vmem:[#allocation3] sm:$0xff] %v1075
      %1202 = vst [vmem:[#allocation3 + $0x8] sm:$0xff] %v1078
      %1203 = vst [vmem:[#allocation3 + $0x10] sm:$0xff] %v1083
      %1204 = vst [vmem:[#allocation3 + $0x18] sm:$0xff] %v1086
      %1205 = vst [vmem:[#allocation3 + $0x20] sm:$0xff] %v1091
      %1206 = vst [vmem:[#allocation3 + $0x28] sm:$0xff] %v1094
      %1207 = vst [vmem:[#allocation3 + $0x30] sm:$0xff] %v1099
      %1208 = vst [vmem:[#allocation3 + $0x38] sm:$0xff] %v1102
      %1209 = vst [vmem:[#allocation3 + $0x40] sm:$0xff] %v1107
      %1210 = vst [vmem:[#allocation3 + $0x48] sm:$0xff] %v1110
      %1211 = vst [vmem:[#allocation3 + $0x50] sm:$0xff] %v1115
      %1212 = vst [vmem:[#allocation3 + $0x58] sm:$0xff] %v1118
      %1213 = vst [vmem:[#allocation3 + $0x60] sm:$0xff] %v1123
      %1214 = vst [vmem:[#allocation3 + $0x68] sm:$0xff] %v1126
      %1215 = vst [vmem:[#allocation3 + $0x70] sm:$0xff] %v1131
      %1216 = vst [vmem:[#allocation3 + $0x78] sm:$0xff] %v1134
      %1217 = vst [vmem:[#allocation3 + $0x80] sm:$0xff] %v1139
      %1218 = vst [vmem:[#allocation3 + $0x88] sm:$0xff] %v1142
      %1219 = vst [vmem:[#allocation3 + $0x90] sm:$0xff] %v1147
      %1220 = vst [vmem:[#allocation3 + $0x98] sm:$0xff] %v1150
      %1221 = vst [vmem:[#allocation3 + $0xa0] sm:$0xff] %v1155
      %1222 = vst [vmem:[#allocation3 + $0xa8] sm:$0xff] %v1158
      %1223 = vst [vmem:[#allocation3 + $0xb0] sm:$0xff] %v1163
      %1224 = vst [vmem:[#allocation3 + $0xb8] sm:$0xff] %v1166
      %1225 = vst [vmem:[#allocation3 + $0xc0] sm:$0xff] %v1171
      %1226 = vst [vmem:[#allocation3 + $0xc8] sm:$0xff] %v1174
      %1227 = vst [vmem:[#allocation3 + $0xd0] sm:$0xff] %v1179
      %1228 = vst [vmem:[#allocation3 + $0xd8] sm:$0xff] %v1182
      %1229 = vst [vmem:[#allocation3 + $0xe0] sm:$0xff] %v1187
      %1230 = vst [vmem:[#allocation3 + $0xe8] sm:$0xff] %v1190
      %1231 = vst [vmem:[#allocation3 + $0xf0] sm:$0xff] %v1195
      %1232 = vst [vmem:[#allocation3 + $0xf8] sm:$0xff] %v1198
      %v1233 = vld [vmem:[#allocation3] sm:$0xff]
      %v1234 = vld [vmem:[#allocation3 + $0x8] sm:$0xff]
      %v1235 = vld [vmem:[#allocation3 + $0x10] sm:$0xff]
      %v1236 = vld [vmem:[#allocation3 + $0x18] sm:$0xff]
      %v1237 = vld [vmem:[#allocation3 + $0x20] sm:$0xff]
      %v1238 = vld [vmem:[#allocation3 + $0x28] sm:$0xff]
      %v1239 = vld [vmem:[#allocation3 + $0x30] sm:$0xff]
      %v1240 = vld [vmem:[#allocation3 + $0x38] sm:$0xff]
      %v1241 = vld [vmem:[#allocation3 + $0x40] sm:$0xff]
      %v1242 = vld [vmem:[#allocation3 + $0x48] sm:$0xff]
      %v1243 = vld [vmem:[#allocation3 + $0x50] sm:$0xff]
      %v1244 = vld [vmem:[#allocation3 + $0x58] sm:$0xff]
      %v1245 = vld [vmem:[#allocation3 + $0x60] sm:$0xff]
      %v1246 = vld [vmem:[#allocation3 + $0x68] sm:$0xff]
      %v1247 = vld [vmem:[#allocation3 + $0x70] sm:$0xff]
      %v1248 = vld [vmem:[#allocation3 + $0x78] sm:$0xff]
      %v1249 = vld [vmem:[#allocation3 + $0x80] sm:$0xff]
      %v1250 = vld [vmem:[#allocation3 + $0x88] sm:$0xff]
      %v1251 = vld [vmem:[#allocation3 + $0x90] sm:$0xff]
      %v1252 = vld [vmem:[#allocation3 + $0x98] sm:$0xff]
      %v1253 = vld [vmem:[#allocation3 + $0xa0] sm:$0xff]
      %v1254 = vld [vmem:[#allocation3 + $0xa8] sm:$0xff]
      %v1255 = vld [vmem:[#allocation3 + $0xb0] sm:$0xff]
      %v1256 = vld [vmem:[#allocation3 + $0xb8] sm:$0xff]
      %v1257 = vld [vmem:[#allocation3 + $0xc0] sm:$0xff]
      %v1258 = vld [vmem:[#allocation3 + $0xc8] sm:$0xff]
      %v1259 = vld [vmem:[#allocation3 + $0xd0] sm:$0xff]
      %v1260 = vld [vmem:[#allocation3 + $0xd8] sm:$0xff]
      %v1261 = vld [vmem:[#allocation3 + $0xe0] sm:$0xff]
      %v1262 = vld [vmem:[#allocation3 + $0xe8] sm:$0xff]
      %v1263 = vld [vmem:[#allocation3 + $0xf0] sm:$0xff]
      %v1264 = vld [vmem:[#allocation3 + $0xf8] sm:$0xff]
      %vm1265 = vcmp.gt.f32.partialorder %v1233, 0.0
      %vm1266 = vcmp.gt.f32.partialorder %v1234, 0.0
      %vm1267 = vcmp.gt.f32.partialorder %v1235, 0.0
      %vm1268 = vcmp.gt.f32.partialorder %v1236, 0.0
      %vm1269 = vcmp.gt.f32.partialorder %v1237, 0.0
      %vm1270 = vcmp.gt.f32.partialorder %v1238, 0.0
      %vm1271 = vcmp.gt.f32.partialorder %v1239, 0.0
      %vm1272 = vcmp.gt.f32.partialorder %v1240, 0.0
      %vm1273 = vcmp.gt.f32.partialorder %v1241, 0.0
      %vm1274 = vcmp.gt.f32.partialorder %v1242, 0.0
      %vm1275 = vcmp.gt.f32.partialorder %v1243, 0.0
      %vm1276 = vcmp.gt.f32.partialorder %v1244, 0.0
      %vm1277 = vcmp.gt.f32.partialorder %v1245, 0.0
      %vm1278 = vcmp.gt.f32.partialorder %v1246, 0.0
      %vm1279 = vcmp.gt.f32.partialorder %v1247, 0.0
      %vm1280 = vcmp.gt.f32.partialorder %v1248, 0.0
      %vm1281 = vcmp.gt.f32.partialorder %v1249, 0.0
      %vm1282 = vcmp.gt.f32.partialorder %v1250, 0.0
      %vm1283 = vcmp.gt.f32.partialorder %v1251, 0.0
      %vm1284 = vcmp.gt.f32.partialorder %v1252, 0.0
      %vm1285 = vcmp.gt.f32.partialorder %v1253, 0.0
      %vm1286 = vcmp.gt.f32.partialorder %v1254, 0.0
      %vm1287 = vcmp.gt.f32.partialorder %v1255, 0.0
      %vm1288 = vcmp.gt.f32.partialorder %v1256, 0.0
      %vm1289 = vcmp.gt.f32.partialorder %v1257, 0.0
      %vm1290 = vcmp.gt.f32.partialorder %v1258, 0.0
      %vm1291 = vcmp.gt.f32.partialorder %v1259, 0.0
      %vm1292 = vcmp.gt.f32.partialorder %v1260, 0.0
      %vm1293 = vcmp.gt.f32.partialorder %v1261, 0.0
      %vm1294 = vcmp.gt.f32.partialorder %v1262, 0.0
      %vm1295 = vcmp.gt.f32.partialorder %v1263, 0.0
      %vm1296 = vcmp.gt.f32.partialorder %v1264, 0.0
      %v1297 = vmul.f32 %v1233, 0.25
      %v1298 = vmul.f32 %v1234, 0.25
      %v1299 = vmul.f32 %v1235, 0.25
      %v1300 = vmul.f32 %v1236, 0.25
      %v1301 = vmul.f32 %v1237, 0.25
      %v1302 = vmul.f32 %v1238, 0.25
      %v1303 = vmul.f32 %v1239, 0.25
      %v1304 = vmul.f32 %v1240, 0.25
      %v1305 = vmul.f32 %v1241, 0.25
      %v1306 = vmul.f32 %v1242, 0.25
      %v1307 = vmul.f32 %v1243, 0.25
      %v1308 = vmul.f32 %v1244, 0.25
      %v1309 = vmul.f32 %v1245, 0.25
      %v1310 = vmul.f32 %v1246, 0.25
      %v1311 = vmul.f32 %v1247, 0.25
      %v1312 = vmul.f32 %v1248, 0.25
      %v1313 = vmul.f32 %v1249, 0.25
      %v1314 = vmul.f32 %v1250, 0.25
      %v1315 = vmul.f32 %v1251, 0.25
      %v1316 = vmul.f32 %v1252, 0.25
      %v1317 = vmul.f32 %v1253, 0.25
      %v1318 = vmul.f32 %v1254, 0.25
      %v1319 = vmul.f32 %v1255, 0.25
      %v1320 = vmul.f32 %v1256, 0.25
      %v1321 = vmul.f32 %v1257, 0.25
      %v1322 = vmul.f32 %v1258, 0.25
      %v1323 = vmul.f32 %v1259, 0.25
      %v1324 = vmul.f32 %v1260, 0.25
      %v1325 = vmul.f32 %v1261, 0.25
      %v1326 = vmul.f32 %v1262, 0.25
      %v1327 = vmul.f32 %v1263, 0.25
      %v1328 = vmul.f32 %v1264, 0.25
      %v1329 = vsel %vm1265, %v1233, %v1297
      %v1330 = vsel %vm1266, %v1234, %v1298
      %v1331 = vsel %vm1267, %v1235, %v1299
      %v1332 = vsel %vm1268, %v1236, %v1300
      %v1333 = vsel %vm1269, %v1237, %v1301
      %v1334 = vsel %vm1270, %v1238, %v1302
      %v1335 = vsel %vm1271, %v1239, %v1303
      %v1336 = vsel %vm1272, %v1240, %v1304
      %v1337 = vsel %vm1273, %v1241, %v1305
      %v1338 = vsel %vm1274, %v1242, %v1306
      %v1339 = vsel %vm1275, %v1243, %v1307
      %v1340 = vsel %vm1276, %v1244, %v1308
      %v1341 = vsel %vm1277, %v1245, %v1309
      %v1342 = vsel %vm1278, %v1246, %v1310
      %v1343 = vsel %vm1279, %v1247, %v1311
      %v1344 = vsel %vm1280, %v1248, %v1312
      %v1345 = vsel %vm1281, %v1249, %v1313
      %v1346 = vsel %vm1282, %v1250, %v1314
      %v1347 = vsel %vm1283, %v1251, %v1315
      %v1348 = vsel %vm1284, %v1252, %v1316
      %v1349 = vsel %vm1285, %v1253, %v1317
      %v1350 = vsel %vm1286, %v1254, %v1318
      %v1351 = vsel %vm1287, %v1255, %v1319
      %v1352 = vsel %vm1288, %v1256, %v1320
      %v1353 = vsel %vm1289, %v1257, %v1321
      %v1354 = vsel %vm1290, %v1258, %v1322
      %v1355 = vsel %vm1291, %v1259, %v1323
      %v1356 = vsel %vm1292, %v1260, %v1324
      %v1357 = vsel %vm1293, %v1261, %v1325
      %v1358 = vsel %vm1294, %v1262, %v1326
      %v1359 = vsel %vm1295, %v1263, %v1327
      %v1360 = vsel %vm1296, %v1264, %v1328
      %v1361 = vld [vmem:[#allocation2] sm:$0xff]
      %v1362 = vld [vmem:[#allocation2 + $0x8] sm:$0xff]
      %v1363 = vld [vmem:[#allocation2 + $0x10] sm:$0xff]
      %v1364 = vld [vmem:[#allocation2 + $0x18] sm:$0xff]
      %v1365 = vld [vmem:[#allocation2 + $0x20] sm:$0xff]
      %v1366 = vld [vmem:[#allocation2 + $0x28] sm:$0xff]
      %v1367 = vld [vmem:[#allocation2 + $0x30] sm:$0xff]
      %v1368 = vld [vmem:[#allocation2 + $0x38] sm:$0xff]
      %v1369 = vld [vmem:[#allocation2 + $0x40] sm:$0xff]
      %v1370 = vld [vmem:[#allocation2 + $0x48] sm:$0xff]
      %v1371 = vld [vmem:[#allocation2 + $0x50] sm:$0xff]
      %v1372 = vld [vmem:[#allocation2 + $0x58] sm:$0xff]
      %v1373 = vld [vmem:[#allocation2 + $0x60] sm:$0xff]
      %v1374 = vld [vmem:[#allocation2 + $0x68] sm:$0xff]
      %v1375 = vld [vmem:[#allocation2 + $0x70] sm:$0xff]
      %v1376 = vld [vmem:[#allocation2 + $0x78] sm:$0xff]
      %v1377 = vld [vmem:[#allocation2 + $0x80] sm:$0xff]
      %v1378 = vld [vmem:[#allocation2 + $0x88] sm:$0xff]
      %v1379 = vld [vmem:[#allocation2 + $0x90] sm:$0xff]
      %v1380 = vld [vmem:[#allocation2 + $0x98] sm:$0xff]
      %v1381 = vld [vmem:[#allocation2 + $0xa0] sm:$0xff]
      %v1382 = vld [vmem:[#allocation2 + $0xa8] sm:$0xff]
      %v1383 = vld [vmem:[#allocation2 + $0xb0] sm:$0xff]
      %v1384 = vld [vmem:[#allocation2 + $0xb8] sm:$0xff]
      %v1385 = vld [vmem:[#allocation2 + $0xc0] sm:$0xff]
      %v1386 = vld [vmem:[#allocation2 + $0xc8] sm:$0xff]
      %v1387 = vld [vmem:[#allocation2 + $0xd0] sm:$0xff]
      %v1388 = vld [vmem:[#allocation2 + $0xd8] sm:$0xff]
      %v1389 = vld [vmem:[#allocation2 + $0xe0] sm:$0xff]
      %v1390 = vld [vmem:[#allocation2 + $0xe8] sm:$0xff]
      %v1391 = vld [vmem:[#allocation2 + $0xf0] sm:$0xff]
      %v1392 = vld [vmem:[#allocation2 + $0xf8] sm:$0xff]
      %v1393 = vadd.f32 %v1329, %v1361
      %v1394 = vadd.f32 %v1330, %v1362
      %v1395 = vadd.f32 %v1331, %v1363
      %v1396 = vadd.f32 %v1332, %v1364
      %v1397 = vadd.f32 %v1333, %v1365
      %v1398 = vadd.f32 %v1334, %v1366
      %v1399 = vadd.f32 %v1335, %v1367
      %v1400 = vadd.f32 %v1336, %v1368
      %v1401 = vadd.f32 %v1337, %v1369
      %v1402 = vadd.f32 %v1338, %v1370
      %v1403 = vadd.f32 %v1339, %v1371
      %v1404 = vadd.f32 %v1340, %v1372
      %v1405 = vadd.f32 %v1341, %v1373
      %v1406 = vadd.f32 %v1342, %v1374
      %v1407 = vadd.f32 %v1343, %v1375
      %v1408 = vadd.f32 %v1344, %v1376
      %v1409 = vadd.f32 %v1345, %v1377
      %v1410 = vadd.f32 %v1346, %v1378
      %v1411 = vadd.f32 %v1347, %v1379
      %v1412 = vadd.f32 %v1348, %v1380
      %v1413 = vadd.f32 %v1349, %v1381
      %v1414 = vadd.f32 %v1350, %v1382
      %v1415 = vadd.f32 %v1351, %v1383
      %v1416 = vadd.f32 %v1352, %v1384
      %v1417 = vadd.f32 %v1353, %v1385
      %v1418 = vadd.f32 %v1354, %v1386
      %v1419 = vadd.f32 %v1355, %v1387
      %v1420 = vadd.f32 %v1356, %v1388
      %v1421 = vadd.f32 %v1357, %v1389
      %v1422 = vadd.f32 %v1358, %v1390
      %v1423 = vadd.f32 %v1359, %v1391
      %v1424 = vadd.f32 %v1360, %v1392
      %v1425 = vpack.c.bf16 %v1394, %v1393
      %v1426 = vpack.c.bf16 %v1396, %v1395
      %v1427 = vpack.c.bf16 %v1398, %v1397
      %v1428 = vpack.c.bf16 %v1400, %v1399
      %v1429 = vpack.c.bf16 %v1402, %v1401
      %v1430 = vpack.c.bf16 %v1404, %v1403
      %v1431 = vpack.c.bf16 %v1406, %v1405
      %v1432 = vpack.c.bf16 %v1408, %v1407
      %v1433 = vpack.c.bf16 %v1410, %v1409
      %v1434 = vpack.c.bf16 %v1412, %v1411
      %v1435 = vpack.c.bf16 %v1414, %v1413
      %v1436 = vpack.c.bf16 %v1416, %v1415
      %v1437 = vpack.c.bf16 %v1418, %v1417
      %v1438 = vpack.c.bf16 %v1420, %v1419
      %v1439 = vpack.c.bf16 %v1422, %v1421
      %v1440 = vpack.c.bf16 %v1424, %v1423
      %v1441 = vld [vmem:[%s5] sm:$0xf]
      %v1442 = vld [vmem:[%s5 + $0x4] sm:$0xf]
      %v1443 = vld [vmem:[%s5 + $0x8] sm:$0xf]
      %v1444 = vld [vmem:[%s5 + $0xc] sm:$0xf]
      %v1445 = vld [vmem:[%s5 + $0x10] sm:$0xf]
      %v1446 = vld [vmem:[%s5 + $0x14] sm:$0xf]
      %v1447 = vld [vmem:[%s5 + $0x18] sm:$0xf]
      %v1448 = vld [vmem:[%s5 + $0x1c] sm:$0xf]
      %v1449 = vld [vmem:[%s5 + $0x20] sm:$0xf]
      %v1450 = vld [vmem:[%s5 + $0x24] sm:$0xf]
      %v1451 = vld [vmem:[%s5 + $0x28] sm:$0xf]
      %v1452 = vld [vmem:[%s5 + $0x2c] sm:$0xf]
      %v1453 = vld [vmem:[%s5 + $0x30] sm:$0xf]
      %v1454 = vld [vmem:[%s5 + $0x34] sm:$0xf]
      %v1455 = vld [vmem:[%s5 + $0x38] sm:$0xf]
      %v1456 = vld [vmem:[%s5 + $0x3c] sm:$0xf]
      %v1457 = vld [vmem:[%s6] sm:$0x1]
      %v1459 = vlaneseq
      %v1460 = vshrl.u32 %v1459, 7
      %v1461 = vsub.s32 0, %v1460
      %v1462 = vrot.slane %v1457, %v1461
      %v1480 = vunpack.c.l.b16 %v1441
      %v1481 = vunpack.c.l.b16 %v1442
      %v1482 = vunpack.c.l.b16 %v1443
      %v1483 = vunpack.c.l.b16 %v1444
      %v1484 = vunpack.c.l.b16 %v1445
      %v1485 = vunpack.c.l.b16 %v1446
      %v1486 = vunpack.c.l.b16 %v1447
      %v1487 = vunpack.c.l.b16 %v1448
      %v1488 = vunpack.c.l.b16 %v1449
      %v1489 = vunpack.c.l.b16 %v1450
      %v1490 = vunpack.c.l.b16 %v1451
      %v1491 = vunpack.c.l.b16 %v1452
      %v1492 = vunpack.c.l.b16 %v1453
      %v1493 = vunpack.c.l.b16 %v1454
      %v1494 = vunpack.c.l.b16 %v1455
      %v1495 = vunpack.c.l.b16 %v1456
      %v1496 = vpack.c.b16 %v1481, %v1480
      %v1497 = vpack.c.b16 %v1483, %v1482
      %v1498 = vpack.c.b16 %v1485, %v1484
      %v1499 = vpack.c.b16 %v1487, %v1486
      %v1500 = vpack.c.b16 %v1489, %v1488
      %v1501 = vpack.c.b16 %v1491, %v1490
      %v1502 = vpack.c.b16 %v1493, %v1492
      %v1503 = vpack.c.b16 %v1495, %v1494
      %1512 = vmatprep.subr.bf16.mxu0 0
      %1513 = vmatpush1.bf16.msra.mxu0 %v1503
      %1514 = vmatprep.subr.bf16.mxu0 0
      %1515 = vmatpush1.bf16.msra.mxu0 %v1502
      %1516 = vmatprep.subr.bf16.mxu0 0
      %1517 = vmatpush1.bf16.msra.mxu0 %v1501
      %1518 = vmatprep.subr.bf16.mxu0 0
      %1519 = vmatpush1.bf16.msra.mxu0 %v1500
      %1520 = vmatprep.subr.bf16.mxu0 0
      %1521 = vmatpush1.bf16.msra.mxu0 %v1499
      %1522 = vmatprep.subr.bf16.mxu0 0
      %1523 = vmatpush1.bf16.msra.mxu0 %v1498
      %1524 = vmatprep.subr.bf16.mxu0 0
      %1525 = vmatpush1.bf16.msra.mxu0 %v1497
      %1526 = vmatprep.subr.bf16.mxu0 0
      %1527 = vmatpush1.bf16.msra.mxu0 %v1496
      %1528 = vmatprep.subr.bf16.mxu0 0
      %1529 = vmatpush2.bf16.msra.mxu0 0
      %1530 = vmatprep.subr.bf16.mxu0 0
      %1531 = vmatpush2.bf16.msra.mxu0 0
      %1532 = vmatprep.subr.bf16.mxu0 0
      %1533 = vmatpush2.bf16.msra.mxu0 0
      %1534 = vmatprep.subr.bf16.mxu0 0
      %1535 = vmatpush2.bf16.msra.mxu0 0
      %1536 = vmatprep.subr.bf16.mxu0 0
      %1537 = vmatpush2.bf16.msra.mxu0 0
      %1538 = vmatprep.subr.bf16.mxu0 0
      %1539 = vmatpush2.bf16.msra.mxu0 0
      %1540 = vmatprep.subr.bf16.mxu0 0
      %1541 = vmatpush2.bf16.msra.mxu0 0
      %1542 = vmatprep.subr.bf16.mxu0 0
      %1543 = vmatpush2.bf16.msra.mxu0 0
      %1544 = vmatprep.mubr.bf16.mxu0 0
      %1545 = vmatmul.mubr.bf16.gmra.mxu0 %v1425
      %v1546 = vpop.f32.mrf.mxu0
      %v1547 = vadd.f32 %v1462, %v1546
      %v1548 = vpop.f32.mrf.mxu0
      %v1549 = vpop.f32.mrf.mxu0
      %v1550 = vadd.f32 %v1462, %v1549
      %v1551 = vpop.f32.mrf.mxu0
      %1552 = vmatprep.mubr.bf16.mxu0 0
      %1553 = vmatmul.mubr.bf16.gmra.mxu0 %v1426
      %v1554 = vpop.f32.mrf.mxu0
      %v1555 = vadd.f32 %v1462, %v1554
      %v1556 = vpop.f32.mrf.mxu0
      %v1557 = vpop.f32.mrf.mxu0
      %v1558 = vadd.f32 %v1462, %v1557
      %v1559 = vpop.f32.mrf.mxu0
      %1560 = vmatprep.mubr.bf16.mxu0 0
      %1561 = vmatmul.mubr.bf16.gmra.mxu0 %v1427
      %v1562 = vpop.f32.mrf.mxu0
      %v1563 = vadd.f32 %v1462, %v1562
      %v1564 = vpop.f32.mrf.mxu0
      %v1565 = vpop.f32.mrf.mxu0
      %v1566 = vadd.f32 %v1462, %v1565
      %v1567 = vpop.f32.mrf.mxu0
      %1568 = vmatprep.mubr.bf16.mxu0 0
      %1569 = vmatmul.mubr.bf16.gmra.mxu0 %v1428
      %v1570 = vpop.f32.mrf.mxu0
      %v1571 = vadd.f32 %v1462, %v1570
      %v1572 = vpop.f32.mrf.mxu0
      %v1573 = vpop.f32.mrf.mxu0
      %v1574 = vadd.f32 %v1462, %v1573
      %v1575 = vpop.f32.mrf.mxu0
      %1576 = vmatprep.mubr.bf16.mxu0 0
      %1577 = vmatmul.mubr.bf16.gmra.mxu0 %v1429
      %v1578 = vpop.f32.mrf.mxu0
      %v1579 = vadd.f32 %v1462, %v1578
      %v1580 = vpop.f32.mrf.mxu0
      %v1581 = vpop.f32.mrf.mxu0
      %v1582 = vadd.f32 %v1462, %v1581
      %v1583 = vpop.f32.mrf.mxu0
      %1584 = vmatprep.mubr.bf16.mxu0 0
      %1585 = vmatmul.mubr.bf16.gmra.mxu0 %v1430
      %v1586 = vpop.f32.mrf.mxu0
      %v1587 = vadd.f32 %v1462, %v1586
      %v1588 = vpop.f32.mrf.mxu0
      %v1589 = vpop.f32.mrf.mxu0
      %v1590 = vadd.f32 %v1462, %v1589
      %v1591 = vpop.f32.mrf.mxu0
      %1592 = vmatprep.mubr.bf16.mxu0 0
      %1593 = vmatmul.mubr.bf16.gmra.mxu0 %v1431
      %v1594 = vpop.f32.mrf.mxu0
      %v1595 = vadd.f32 %v1462, %v1594
      %v1596 = vpop.f32.mrf.mxu0
      %v1597 = vpop.f32.mrf.mxu0
      %v1598 = vadd.f32 %v1462, %v1597
      %v1599 = vpop.f32.mrf.mxu0
      %1600 = vmatprep.mubr.bf16.mxu0 0
      %1601 = vmatmul.mubr.bf16.gmra.mxu0 %v1432
      %v1602 = vpop.f32.mrf.mxu0
      %v1603 = vadd.f32 %v1462, %v1602
      %v1604 = vpop.f32.mrf.mxu0
      %v1605 = vpop.f32.mrf.mxu0
      %v1606 = vadd.f32 %v1462, %v1605
      %v1607 = vpop.f32.mrf.mxu0
      %1608 = vmatprep.mubr.bf16.mxu0 0
      %1609 = vmatmul.mubr.bf16.gmra.mxu0 %v1433
      %v1610 = vpop.f32.mrf.mxu0
      %v1611 = vadd.f32 %v1462, %v1610
      %v1612 = vpop.f32.mrf.mxu0
      %v1613 = vpop.f32.mrf.mxu0
      %v1614 = vadd.f32 %v1462, %v1613
      %v1615 = vpop.f32.mrf.mxu0
      %1616 = vmatprep.mubr.bf16.mxu0 0
      %1617 = vmatmul.mubr.bf16.gmra.mxu0 %v1434
      %v1618 = vpop.f32.mrf.mxu0
      %v1619 = vadd.f32 %v1462, %v1618
      %v1620 = vpop.f32.mrf.mxu0
      %v1621 = vpop.f32.mrf.mxu0
      %v1622 = vadd.f32 %v1462, %v1621
      %v1623 = vpop.f32.mrf.mxu0
      %1624 = vmatprep.mubr.bf16.mxu0 0
      %1625 = vmatmul.mubr.bf16.gmra.mxu0 %v1435
      %v1626 = vpop.f32.mrf.mxu0
      %v1627 = vadd.f32 %v1462, %v1626
      %v1628 = vpop.f32.mrf.mxu0
      %v1629 = vpop.f32.mrf.mxu0
      %v1630 = vadd.f32 %v1462, %v1629
      %v1631 = vpop.f32.mrf.mxu0
      %1632 = vmatprep.mubr.bf16.mxu0 0
      %1633 = vmatmul.mubr.bf16.gmra.mxu0 %v1436
      %v1634 = vpop.f32.mrf.mxu0
      %v1635 = vadd.f32 %v1462, %v1634
      %v1636 = vpop.f32.mrf.mxu0
      %v1637 = vpop.f32.mrf.mxu0
      %v1638 = vadd.f32 %v1462, %v1637
      %v1639 = vpop.f32.mrf.mxu0
      %1640 = vmatprep.mubr.bf16.mxu0 0
      %1641 = vmatmul.mubr.bf16.gmra.mxu0 %v1437
      %v1642 = vpop.f32.mrf.mxu0
      %v1643 = vadd.f32 %v1462, %v1642
      %v1644 = vpop.f32.mrf.mxu0
      %v1645 = vpop.f32.mrf.mxu0
      %v1646 = vadd.f32 %v1462, %v1645
      %v1647 = vpop.f32.mrf.mxu0
      %1648 = vmatprep.mubr.bf16.mxu0 0
      %1649 = vmatmul.mubr.bf16.gmra.mxu0 %v1438
      %v1650 = vpop.f32.mrf.mxu0
      %v1651 = vadd.f32 %v1462, %v1650
      %v1652 = vpop.f32.mrf.mxu0
      %v1653 = vpop.f32.mrf.mxu0
      %v1654 = vadd.f32 %v1462, %v1653
      %v1655 = vpop.f32.mrf.mxu0
      %1656 = vmatprep.mubr.bf16.mxu0 0
      %1657 = vmatmul.mubr.bf16.gmra.mxu0 %v1439
      %v1658 = vpop.f32.mrf.mxu0
      %v1659 = vadd.f32 %v1462, %v1658
      %v1660 = vpop.f32.mrf.mxu0
      %v1661 = vpop.f32.mrf.mxu0
      %v1662 = vadd.f32 %v1462, %v1661
      %v1663 = vpop.f32.mrf.mxu0
      %1664 = vmatprep.mubr.bf16.mxu0 0
      %1665 = vmatmul.mubr.bf16.gmra.mxu0 %v1440
      %v1666 = vpop.f32.mrf.mxu0
      %v1667 = vadd.f32 %v1462, %v1666
      %v1668 = vpop.f32.mrf.mxu0
      %v1669 = vpop.f32.mrf.mxu0
      %v1670 = vadd.f32 %v1462, %v1669
      %v1671 = vpop.f32.mrf.mxu0
      %1672 = vdwg.mxu0
      %1673 = vst [vmem:[#allocation3] sm:$0xff] %v1547
      %1674 = vst [vmem:[#allocation3 + $0x8] sm:$0xff] %v1550
      %1675 = vst [vmem:[#allocation3 + $0x10] sm:$0xff] %v1555
      %1676 = vst [vmem:[#allocation3 + $0x18] sm:$0xff] %v1558
      %1677 = vst [vmem:[#allocation3 + $0x20] sm:$0xff] %v1563
      %1678 = vst [vmem:[#allocation3 + $0x28] sm:$0xff] %v1566
      %1679 = vst [vmem:[#allocation3 + $0x30] sm:$0xff] %v1571
      %1680 = vst [vmem:[#allocation3 + $0x38] sm:$0xff] %v1574
      %1681 = vst [vmem:[#allocation3 + $0x40] sm:$0xff] %v1579
      %1682 = vst [vmem:[#allocation3 + $0x48] sm:$0xff] %v1582
      %1683 = vst [vmem:[#allocation3 + $0x50] sm:$0xff] %v1587
      %1684 = vst [vmem:[#allocation3 + $0x58] sm:$0xff] %v1590
      %1685 = vst [vmem:[#allocation3 + $0x60] sm:$0xff] %v1595
      %1686 = vst [vmem:[#allocation3 + $0x68] sm:$0xff] %v1598
      %1687 = vst [vmem:[#allocation3 + $0x70] sm:$0xff] %v1603
      %1688 = vst [vmem:[#allocation3 + $0x78] sm:$0xff] %v1606
      %1689 = vst [vmem:[#allocation3 + $0x80] sm:$0xff] %v1611
      %1690 = vst [vmem:[#allocation3 + $0x88] sm:$0xff] %v1614
      %1691 = vst [vmem:[#allocation3 + $0x90] sm:$0xff] %v1619
      %1692 = vst [vmem:[#allocation3 + $0x98] sm:$0xff] %v1622
      %1693 = vst [vmem:[#allocation3 + $0xa0] sm:$0xff] %v1627
      %1694 = vst [vmem:[#allocation3 + $0xa8] sm:$0xff] %v1630
      %1695 = vst [vmem:[#allocation3 + $0xb0] sm:$0xff] %v1635
      %1696 = vst [vmem:[#allocation3 + $0xb8] sm:$0xff] %v1638
      %1697 = vst [vmem:[#allocation3 + $0xc0] sm:$0xff] %v1643
      %1698 = vst [vmem:[#allocation3 + $0xc8] sm:$0xff] %v1646
      %1699 = vst [vmem:[#allocation3 + $0xd0] sm:$0xff] %v1651
      %1700 = vst [vmem:[#allocation3 + $0xd8] sm:$0xff] %v1654
      %1701 = vst [vmem:[#allocation3 + $0xe0] sm:$0xff] %v1659
      %1702 = vst [vmem:[#allocation3 + $0xe8] sm:$0xff] %v1662
      %1703 = vst [vmem:[#allocation3 + $0xf0] sm:$0xff] %v1667
      %1704 = vst [vmem:[#allocation3 + $0xf8] sm:$0xff] %v1670
      %v1705 = vld [vmem:[#allocation3] sm:$0xff]
      %v1706 = vld [vmem:[#allocation3 + $0x8] sm:$0xff]
      %v1707 = vld [vmem:[#allocation3 + $0x10] sm:$0xff]
      %v1708 = vld [vmem:[#allocation3 + $0x18] sm:$0xff]
      %v1709 = vld [vmem:[#allocation3 + $0x20] sm:$0xff]
      %v1710 = vld [vmem:[#allocation3 + $0x28] sm:$0xff]
      %v1711 = vld [vmem:[#allocation3 + $0x30] sm:$0xff]
      %v1712 = vld [vmem:[#allocation3 + $0x38] sm:$0xff]
      %v1713 = vld [vmem:[#allocation3 + $0x40] sm:$0xff]
      %v1714 = vld [vmem:[#allocation3 + $0x48] sm:$0xff]
      %v1715 = vld [vmem:[#allocation3 + $0x50] sm:$0xff]
      %v1716 = vld [vmem:[#allocation3 + $0x58] sm:$0xff]
      %v1717 = vld [vmem:[#allocation3 + $0x60] sm:$0xff]
      %v1718 = vld [vmem:[#allocation3 + $0x68] sm:$0xff]
      %v1719 = vld [vmem:[#allocation3 + $0x70] sm:$0xff]
      %v1720 = vld [vmem:[#allocation3 + $0x78] sm:$0xff]
      %v1721 = vld [vmem:[#allocation3 + $0x80] sm:$0xff]
      %v1722 = vld [vmem:[#allocation3 + $0x88] sm:$0xff]
      %v1723 = vld [vmem:[#allocation3 + $0x90] sm:$0xff]
      %v1724 = vld [vmem:[#allocation3 + $0x98] sm:$0xff]
      %v1725 = vld [vmem:[#allocation3 + $0xa0] sm:$0xff]
      %v1726 = vld [vmem:[#allocation3 + $0xa8] sm:$0xff]
      %v1727 = vld [vmem:[#allocation3 + $0xb0] sm:$0xff]
      %v1728 = vld [vmem:[#allocation3 + $0xb8] sm:$0xff]
      %v1729 = vld [vmem:[#allocation3 + $0xc0] sm:$0xff]
      %v1730 = vld [vmem:[#allocation3 + $0xc8] sm:$0xff]
      %v1731 = vld [vmem:[#allocation3 + $0xd0] sm:$0xff]
      %v1732 = vld [vmem:[#allocation3 + $0xd8] sm:$0xff]
      %v1733 = vld [vmem:[#allocation3 + $0xe0] sm:$0xff]
      %v1734 = vld [vmem:[#allocation3 + $0xe8] sm:$0xff]
      %v1735 = vld [vmem:[#allocation3 + $0xf0] sm:$0xff]
      %v1736 = vld [vmem:[#allocation3 + $0xf8] sm:$0xff]
      %vm1737 = vcmp.gt.f32.partialorder %v1705, 0.0
      %vm1738 = vcmp.gt.f32.partialorder %v1706, 0.0
      %vm1739 = vcmp.gt.f32.partialorder %v1707, 0.0
      %vm1740 = vcmp.gt.f32.partialorder %v1708, 0.0
      %vm1741 = vcmp.gt.f32.partialorder %v1709, 0.0
      %vm1742 = vcmp.gt.f32.partialorder %v1710, 0.0
      %vm1743 = vcmp.gt.f32.partialorder %v1711, 0.0
      %vm1744 = vcmp.gt.f32.partialorder %v1712, 0.0
      %vm1745 = vcmp.gt.f32.partialorder %v1713, 0.0
      %vm1746 = vcmp.gt.f32.partialorder %v1714, 0.0
      %vm1747 = vcmp.gt.f32.partialorder %v1715, 0.0
      %vm1748 = vcmp.gt.f32.partialorder %v1716, 0.0
      %vm1749 = vcmp.gt.f32.partialorder %v1717, 0.0
      %vm1750 = vcmp.gt.f32.partialorder %v1718, 0.0
      %vm1751 = vcmp.gt.f32.partialorder %v1719, 0.0
      %vm1752 = vcmp.gt.f32.partialorder %v1720, 0.0
      %vm1753 = vcmp.gt.f32.partialorder %v1721, 0.0
      %vm1754 = vcmp.gt.f32.partialorder %v1722, 0.0
      %vm1755 = vcmp.gt.f32.partialorder %v1723, 0.0
      %vm1756 = vcmp.gt.f32.partialorder %v1724, 0.0
      %vm1757 = vcmp.gt.f32.partialorder %v1725, 0.0
      %vm1758 = vcmp.gt.f32.partialorder %v1726, 0.0
      %vm1759 = vcmp.gt.f32.partialorder %v1727, 0.0
      %vm1760 = vcmp.gt.f32.partialorder %v1728, 0.0
      %vm1761 = vcmp.gt.f32.partialorder %v1729, 0.0
      %vm1762 = vcmp.gt.f32.partialorder %v1730, 0.0
      %vm1763 = vcmp.gt.f32.partialorder %v1731, 0.0
      %vm1764 = vcmp.gt.f32.partialorder %v1732, 0.0
      %vm1765 = vcmp.gt.f32.partialorder %v1733, 0.0
      %vm1766 = vcmp.gt.f32.partialorder %v1734, 0.0
      %vm1767 = vcmp.gt.f32.partialorder %v1735, 0.0
      %vm1768 = vcmp.gt.f32.partialorder %v1736, 0.0
      %v1769 = vmul.f32 %v1705, 0.25
      %v1770 = vmul.f32 %v1706, 0.25
      %v1771 = vmul.f32 %v1707, 0.25
      %v1772 = vmul.f32 %v1708, 0.25
      %v1773 = vmul.f32 %v1709, 0.25
      %v1774 = vmul.f32 %v1710, 0.25
      %v1775 = vmul.f32 %v1711, 0.25
      %v1776 = vmul.f32 %v1712, 0.25
      %v1777 = vmul.f32 %v1713, 0.25
      %v1778 = vmul.f32 %v1714, 0.25
      %v1779 = vmul.f32 %v1715, 0.25
      %v1780 = vmul.f32 %v1716, 0.25
      %v1781 = vmul.f32 %v1717, 0.25
      %v1782 = vmul.f32 %v1718, 0.25
      %v1783 = vmul.f32 %v1719, 0.25
      %v1784 = vmul.f32 %v1720, 0.25
      %v1785 = vmul.f32 %v1721, 0.25
      %v1786 = vmul.f32 %v1722, 0.25
      %v1787 = vmul.f32 %v1723, 0.25
      %v1788 = vmul.f32 %v1724, 0.25
      %v1789 = vmul.f32 %v1725, 0.25
      %v1790 = vmul.f32 %v1726, 0.25
      %v1791 = vmul.f32 %v1727, 0.25
      %v1792 = vmul.f32 %v1728, 0.25
      %v1793 = vmul.f32 %v1729, 0.25
      %v1794 = vmul.f32 %v1730, 0.25
      %v1795 = vmul.f32 %v1731, 0.25
      %v1796 = vmul.f32 %v1732, 0.25
      %v1797 = vmul.f32 %v1733, 0.25
      %v1798 = vmul.f32 %v1734, 0.25
      %v1799 = vmul.f32 %v1735, 0.25
      %v1800 = vmul.f32 %v1736, 0.25
      %v1801 = vsel %vm1737, %v1705, %v1769
      %v1802 = vsel %vm1738, %v1706, %v1770
      %v1803 = vsel %vm1739, %v1707, %v1771
      %v1804 = vsel %vm1740, %v1708, %v1772
      %v1805 = vsel %vm1741, %v1709, %v1773
      %v1806 = vsel %vm1742, %v1710, %v1774
      %v1807 = vsel %vm1743, %v1711, %v1775
      %v1808 = vsel %vm1744, %v1712, %v1776
      %v1809 = vsel %vm1745, %v1713, %v1777
      %v1810 = vsel %vm1746, %v1714, %v1778
      %v1811 = vsel %vm1747, %v1715, %v1779
      %v1812 = vsel %vm1748, %v1716, %v1780
      %v1813 = vsel %vm1749, %v1717, %v1781
      %v1814 = vsel %vm1750, %v1718, %v1782
      %v1815 = vsel %vm1751, %v1719, %v1783
      %v1816 = vsel %vm1752, %v1720, %v1784
      %v1817 = vsel %vm1753, %v1721, %v1785
      %v1818 = vsel %vm1754, %v1722, %v1786
      %v1819 = vsel %vm1755, %v1723, %v1787
      %v1820 = vsel %vm1756, %v1724, %v1788
      %v1821 = vsel %vm1757, %v1725, %v1789
      %v1822 = vsel %vm1758, %v1726, %v1790
      %v1823 = vsel %vm1759, %v1727, %v1791
      %v1824 = vsel %vm1760, %v1728, %v1792
      %v1825 = vsel %vm1761, %v1729, %v1793
      %v1826 = vsel %vm1762, %v1730, %v1794
      %v1827 = vsel %vm1763, %v1731, %v1795
      %v1828 = vsel %vm1764, %v1732, %v1796
      %v1829 = vsel %vm1765, %v1733, %v1797
      %v1830 = vsel %vm1766, %v1734, %v1798
      %v1831 = vsel %vm1767, %v1735, %v1799
      %v1832 = vsel %vm1768, %v1736, %v1800
      %v1833 = vpack.c.bf16 %v1802, %v1801
      %v1834 = vpack.c.bf16 %v1804, %v1803
      %v1835 = vpack.c.bf16 %v1806, %v1805
      %v1836 = vpack.c.bf16 %v1808, %v1807
      %v1837 = vpack.c.bf16 %v1810, %v1809
      %v1838 = vpack.c.bf16 %v1812, %v1811
      %v1839 = vpack.c.bf16 %v1814, %v1813
      %v1840 = vpack.c.bf16 %v1816, %v1815
      %v1841 = vpack.c.bf16 %v1818, %v1817
      %v1842 = vpack.c.bf16 %v1820, %v1819
      %v1843 = vpack.c.bf16 %v1822, %v1821
      %v1844 = vpack.c.bf16 %v1824, %v1823
      %v1845 = vpack.c.bf16 %v1826, %v1825
      %v1846 = vpack.c.bf16 %v1828, %v1827
      %v1847 = vpack.c.bf16 %v1830, %v1829
      %v1848 = vpack.c.bf16 %v1832, %v1831
      %v1849 = vld [vmem:[%s7] sm:$0xf]
      %v1850 = vld [vmem:[%s7 + $0x4] sm:$0xf]
      %v1851 = vld [vmem:[%s7 + $0x8] sm:$0xf]
      %v1852 = vld [vmem:[%s7 + $0xc] sm:$0xf]
      %v1853 = vld [vmem:[%s7 + $0x10] sm:$0xf]
      %v1854 = vld [vmem:[%s7 + $0x14] sm:$0xf]
      %v1855 = vld [vmem:[%s7 + $0x18] sm:$0xf]
      %v1856 = vld [vmem:[%s7 + $0x1c] sm:$0xf]
      %v1857 = vld [vmem:[%s7 + $0x20] sm:$0xf]
      %v1858 = vld [vmem:[%s7 + $0x24] sm:$0xf]
      %v1859 = vld [vmem:[%s7 + $0x28] sm:$0xf]
      %v1860 = vld [vmem:[%s7 + $0x2c] sm:$0xf]
      %v1861 = vld [vmem:[%s7 + $0x30] sm:$0xf]
      %v1862 = vld [vmem:[%s7 + $0x34] sm:$0xf]
      %v1863 = vld [vmem:[%s7 + $0x38] sm:$0xf]
      %v1864 = vld [vmem:[%s7 + $0x3c] sm:$0xf]
      %v1865 = vld [vmem:[%s8] sm:$0x1]
      %v1867 = vlaneseq
      %v1868 = vshrl.u32 %v1867, 7
      %v1869 = vsub.s32 0, %v1868
      %v1870 = vrot.slane %v1865, %v1869
      %v1888 = vunpack.c.l.b16 %v1849
      %v1889 = vunpack.c.l.b16 %v1850
      %v1890 = vunpack.c.l.b16 %v1851
      %v1891 = vunpack.c.l.b16 %v1852
      %v1892 = vunpack.c.l.b16 %v1853
      %v1893 = vunpack.c.l.b16 %v1854
      %v1894 = vunpack.c.l.b16 %v1855
      %v1895 = vunpack.c.l.b16 %v1856
      %v1896 = vunpack.c.l.b16 %v1857
      %v1897 = vunpack.c.l.b16 %v1858
      %v1898 = vunpack.c.l.b16 %v1859
      %v1899 = vunpack.c.l.b16 %v1860
      %v1900 = vunpack.c.l.b16 %v1861
      %v1901 = vunpack.c.l.b16 %v1862
      %v1902 = vunpack.c.l.b16 %v1863
      %v1903 = vunpack.c.l.b16 %v1864
      %v1904 = vpack.c.b16 %v1889, %v1888
      %v1905 = vpack.c.b16 %v1891, %v1890
      %v1906 = vpack.c.b16 %v1893, %v1892
      %v1907 = vpack.c.b16 %v1895, %v1894
      %v1908 = vpack.c.b16 %v1897, %v1896
      %v1909 = vpack.c.b16 %v1899, %v1898
      %v1910 = vpack.c.b16 %v1901, %v1900
      %v1911 = vpack.c.b16 %v1903, %v1902
      %1920 = vmatprep.subr.bf16.mxu0 0
      %1921 = vmatpush1.bf16.msra.mxu0 %v1911
      %1922 = vmatprep.subr.bf16.mxu0 0
      %1923 = vmatpush1.bf16.msra.mxu0 %v1910
      %1924 = vmatprep.subr.bf16.mxu0 0
      %1925 = vmatpush1.bf16.msra.mxu0 %v1909
      %1926 = vmatprep.subr.bf16.mxu0 0
      %1927 = vmatpush1.bf16.msra.mxu0 %v1908
      %1928 = vmatprep.subr.bf16.mxu0 0
      %1929 = vmatpush1.bf16.msra.mxu0 %v1907
      %1930 = vmatprep.subr.bf16.mxu0 0
      %1931 = vmatpush1.bf16.msra.mxu0 %v1906
      %1932 = vmatprep.subr.bf16.mxu0 0
      %1933 = vmatpush1.bf16.msra.mxu0 %v1905
      %1934 = vmatprep.subr.bf16.mxu0 0
      %1935 = vmatpush1.bf16.msra.mxu0 %v1904
      %1936 = vmatprep.subr.bf16.mxu0 0
      %1937 = vmatpush2.bf16.msra.mxu0 0
      %1938 = vmatprep.subr.bf16.mxu0 0
      %1939 = vmatpush2.bf16.msra.mxu0 0
      %1940 = vmatprep.subr.bf16.mxu0 0
      %1941 = vmatpush2.bf16.msra.mxu0 0
      %1942 = vmatprep.subr.bf16.mxu0 0
      %1943 = vmatpush2.bf16.msra.mxu0 0
      %1944 = vmatprep.subr.bf16.mxu0 0
      %1945 = vmatpush2.bf16.msra.mxu0 0
      %1946 = vmatprep.subr.bf16.mxu0 0
      %1947 = vmatpush2.bf16.msra.mxu0 0
      %1948 = vmatprep.subr.bf16.mxu0 0
      %1949 = vmatpush2.bf16.msra.mxu0 0
      %1950 = vmatprep.subr.bf16.mxu0 0
      %1951 = vmatpush2.bf16.msra.mxu0 0
      %1952 = vmatprep.mubr.bf16.mxu0 0
      %1953 = vmatmul.mubr.bf16.gmra.mxu0 %v1833
      %v1954 = vpop.f32.mrf.mxu0
      %v1955 = vadd.f32 %v1870, %v1954
      %v1956 = vpop.f32.mrf.mxu0
      %v1957 = vpop.f32.mrf.mxu0
      %v1958 = vadd.f32 %v1870, %v1957
      %v1959 = vpop.f32.mrf.mxu0
      %1960 = vmatprep.mubr.bf16.mxu0 0
      %1961 = vmatmul.mubr.bf16.gmra.mxu0 %v1834
      %v1962 = vpop.f32.mrf.mxu0
      %v1963 = vadd.f32 %v1870, %v1962
      %v1964 = vpop.f32.mrf.mxu0
      %v1965 = vpop.f32.mrf.mxu0
      %v1966 = vadd.f32 %v1870, %v1965
      %v1967 = vpop.f32.mrf.mxu0
      %1968 = vmatprep.mubr.bf16.mxu0 0
      %1969 = vmatmul.mubr.bf16.gmra.mxu0 %v1835
      %v1970 = vpop.f32.mrf.mxu0
      %v1971 = vadd.f32 %v1870, %v1970
      %v1972 = vpop.f32.mrf.mxu0
      %v1973 = vpop.f32.mrf.mxu0
      %v1974 = vadd.f32 %v1870, %v1973
      %v1975 = vpop.f32.mrf.mxu0
      %1976 = vmatprep.mubr.bf16.mxu0 0
      %1977 = vmatmul.mubr.bf16.gmra.mxu0 %v1836
      %v1978 = vpop.f32.mrf.mxu0
      %v1979 = vadd.f32 %v1870, %v1978
      %v1980 = vpop.f32.mrf.mxu0
      %v1981 = vpop.f32.mrf.mxu0
      %v1982 = vadd.f32 %v1870, %v1981
      %v1983 = vpop.f32.mrf.mxu0
      %1984 = vmatprep.mubr.bf16.mxu0 0
      %1985 = vmatmul.mubr.bf16.gmra.mxu0 %v1837
      %v1986 = vpop.f32.mrf.mxu0
      %v1987 = vadd.f32 %v1870, %v1986
      %v1988 = vpop.f32.mrf.mxu0
      %v1989 = vpop.f32.mrf.mxu0
      %v1990 = vadd.f32 %v1870, %v1989
      %v1991 = vpop.f32.mrf.mxu0
      %1992 = vmatprep.mubr.bf16.mxu0 0
      %1993 = vmatmul.mubr.bf16.gmra.mxu0 %v1838
      %v1994 = vpop.f32.mrf.mxu0
      %v1995 = vadd.f32 %v1870, %v1994
      %v1996 = vpop.f32.mrf.mxu0
      %v1997 = vpop.f32.mrf.mxu0
      %v1998 = vadd.f32 %v1870, %v1997
      %v1999 = vpop.f32.mrf.mxu0
      %2000 = vmatprep.mubr.bf16.mxu0 0
      %2001 = vmatmul.mubr.bf16.gmra.mxu0 %v1839
      %v2002 = vpop.f32.mrf.mxu0
      %v2003 = vadd.f32 %v1870, %v2002
      %v2004 = vpop.f32.mrf.mxu0
      %v2005 = vpop.f32.mrf.mxu0
      %v2006 = vadd.f32 %v1870, %v2005
      %v2007 = vpop.f32.mrf.mxu0
      %2008 = vmatprep.mubr.bf16.mxu0 0
      %2009 = vmatmul.mubr.bf16.gmra.mxu0 %v1840
      %v2010 = vpop.f32.mrf.mxu0
      %v2011 = vadd.f32 %v1870, %v2010
      %v2012 = vpop.f32.mrf.mxu0
      %v2013 = vpop.f32.mrf.mxu0
      %v2014 = vadd.f32 %v1870, %v2013
      %v2015 = vpop.f32.mrf.mxu0
      %2016 = vmatprep.mubr.bf16.mxu0 0
      %2017 = vmatmul.mubr.bf16.gmra.mxu0 %v1841
      %v2018 = vpop.f32.mrf.mxu0
      %v2019 = vadd.f32 %v1870, %v2018
      %v2020 = vpop.f32.mrf.mxu0
      %v2021 = vpop.f32.mrf.mxu0
      %v2022 = vadd.f32 %v1870, %v2021
      %v2023 = vpop.f32.mrf.mxu0
      %2024 = vmatprep.mubr.bf16.mxu0 0
      %2025 = vmatmul.mubr.bf16.gmra.mxu0 %v1842
      %v2026 = vpop.f32.mrf.mxu0
      %v2027 = vadd.f32 %v1870, %v2026
      %v2028 = vpop.f32.mrf.mxu0
      %v2029 = vpop.f32.mrf.mxu0
      %v2030 = vadd.f32 %v1870, %v2029
      %v2031 = vpop.f32.mrf.mxu0
      %2032 = vmatprep.mubr.bf16.mxu0 0
      %2033 = vmatmul.mubr.bf16.gmra.mxu0 %v1843
      %v2034 = vpop.f32.mrf.mxu0
      %v2035 = vadd.f32 %v1870, %v2034
      %v2036 = vpop.f32.mrf.mxu0
      %v2037 = vpop.f32.mrf.mxu0
      %v2038 = vadd.f32 %v1870, %v2037
      %v2039 = vpop.f32.mrf.mxu0
      %2040 = vmatprep.mubr.bf16.mxu0 0
      %2041 = vmatmul.mubr.bf16.gmra.mxu0 %v1844
      %v2042 = vpop.f32.mrf.mxu0
      %v2043 = vadd.f32 %v1870, %v2042
      %v2044 = vpop.f32.mrf.mxu0
      %v2045 = vpop.f32.mrf.mxu0
      %v2046 = vadd.f32 %v1870, %v2045
      %v2047 = vpop.f32.mrf.mxu0
      %2048 = vmatprep.mubr.bf16.mxu0 0
      %2049 = vmatmul.mubr.bf16.gmra.mxu0 %v1845
      %v2050 = vpop.f32.mrf.mxu0
      %v2051 = vadd.f32 %v1870, %v2050
      %v2052 = vpop.f32.mrf.mxu0
      %v2053 = vpop.f32.mrf.mxu0
      %v2054 = vadd.f32 %v1870, %v2053
      %v2055 = vpop.f32.mrf.mxu0
      %2056 = vmatprep.mubr.bf16.mxu0 0
      %2057 = vmatmul.mubr.bf16.gmra.mxu0 %v1846
      %v2058 = vpop.f32.mrf.mxu0
      %v2059 = vadd.f32 %v1870, %v2058
      %v2060 = vpop.f32.mrf.mxu0
      %v2061 = vpop.f32.mrf.mxu0
      %v2062 = vadd.f32 %v1870, %v2061
      %v2063 = vpop.f32.mrf.mxu0
      %2064 = vmatprep.mubr.bf16.mxu0 0
      %2065 = vmatmul.mubr.bf16.gmra.mxu0 %v1847
      %v2066 = vpop.f32.mrf.mxu0
      %v2067 = vadd.f32 %v1870, %v2066
      %v2068 = vpop.f32.mrf.mxu0
      %v2069 = vpop.f32.mrf.mxu0
      %v2070 = vadd.f32 %v1870, %v2069
      %v2071 = vpop.f32.mrf.mxu0
      %2072 = vmatprep.mubr.bf16.mxu0 0
      %2073 = vmatmul.mubr.bf16.gmra.mxu0 %v1848
      %v2074 = vpop.f32.mrf.mxu0
      %v2075 = vadd.f32 %v1870, %v2074
      %v2076 = vpop.f32.mrf.mxu0
      %v2077 = vpop.f32.mrf.mxu0
      %v2078 = vadd.f32 %v1870, %v2077
      %v2079 = vpop.f32.mrf.mxu0
      %2080 = vdwg.mxu0
      %v2081 = vadd.f32 %v1955, %v1801
      %v2082 = vadd.f32 %v1958, %v1802
      %v2083 = vadd.f32 %v1963, %v1803
      %v2084 = vadd.f32 %v1966, %v1804
      %v2085 = vadd.f32 %v1971, %v1805
      %v2086 = vadd.f32 %v1974, %v1806
      %v2087 = vadd.f32 %v1979, %v1807
      %v2088 = vadd.f32 %v1982, %v1808
      %v2089 = vadd.f32 %v1987, %v1809
      %v2090 = vadd.f32 %v1990, %v1810
      %v2091 = vadd.f32 %v1995, %v1811
      %v2092 = vadd.f32 %v1998, %v1812
      %v2093 = vadd.f32 %v2003, %v1813
      %v2094 = vadd.f32 %v2006, %v1814
      %v2095 = vadd.f32 %v2011, %v1815
      %v2096 = vadd.f32 %v2014, %v1816
      %v2097 = vadd.f32 %v2019, %v1817
      %v2098 = vadd.f32 %v2022, %v1818
      %v2099 = vadd.f32 %v2027, %v1819
      %v2100 = vadd.f32 %v2030, %v1820
      %v2101 = vadd.f32 %v2035, %v1821
      %v2102 = vadd.f32 %v2038, %v1822
      %v2103 = vadd.f32 %v2043, %v1823
      %v2104 = vadd.f32 %v2046, %v1824
      %v2105 = vadd.f32 %v2051, %v1825
      %v2106 = vadd.f32 %v2054, %v1826
      %v2107 = vadd.f32 %v2059, %v1827
      %v2108 = vadd.f32 %v2062, %v1828
      %v2109 = vadd.f32 %v2067, %v1829
      %v2110 = vadd.f32 %v2070, %v1830
      %v2111 = vadd.f32 %v2075, %v1831
      %v2112 = vadd.f32 %v2078, %v1832
      %2113 = vst [vmem:[%s334] sm:$0xff] %v2081
      %2114 = vst [vmem:[%s334 + $0x8] sm:$0xff] %v2082
      %2115 = vst [vmem:[%s334 + $0x10] sm:$0xff] %v2083
      %2116 = vst [vmem:[%s334 + $0x18] sm:$0xff] %v2084
      %2117 = vst [vmem:[%s334 + $0x20] sm:$0xff] %v2085
      %2118 = vst [vmem:[%s334 + $0x28] sm:$0xff] %v2086
      %2119 = vst [vmem:[%s334 + $0x30] sm:$0xff] %v2087
      %2120 = vst [vmem:[%s334 + $0x38] sm:$0xff] %v2088
      %2121 = vst [vmem:[%s334 + $0x40] sm:$0xff] %v2089
      %2122 = vst [vmem:[%s334 + $0x48] sm:$0xff] %v2090
      %2123 = vst [vmem:[%s334 + $0x50] sm:$0xff] %v2091
      %2124 = vst [vmem:[%s334 + $0x58] sm:$0xff] %v2092
      %2125 = vst [vmem:[%s334 + $0x60] sm:$0xff] %v2093
      %2126 = vst [vmem:[%s334 + $0x68] sm:$0xff] %v2094
      %2127 = vst [vmem:[%s334 + $0x70] sm:$0xff] %v2095
      %2128 = vst [vmem:[%s334 + $0x78] sm:$0xff] %v2096
      %2129 = vst [vmem:[%s334 + $0x80] sm:$0xff] %v2097
      %2130 = vst [vmem:[%s334 + $0x88] sm:$0xff] %v2098
      %2131 = vst [vmem:[%s334 + $0x90] sm:$0xff] %v2099
      %2132 = vst [vmem:[%s334 + $0x98] sm:$0xff] %v2100
      %2133 = vst [vmem:[%s334 + $0xa0] sm:$0xff] %v2101
      %2134 = vst [vmem:[%s334 + $0xa8] sm:$0xff] %v2102
      %2135 = vst [vmem:[%s334 + $0xb0] sm:$0xff] %v2103
      %2136 = vst [vmem:[%s334 + $0xb8] sm:$0xff] %v2104
      %2137 = vst [vmem:[%s334 + $0xc0] sm:$0xff] %v2105
      %2138 = vst [vmem:[%s334 + $0xc8] sm:$0xff] %v2106
      %2139 = vst [vmem:[%s334 + $0xd0] sm:$0xff] %v2107
      %2140 = vst [vmem:[%s334 + $0xd8] sm:$0xff] %v2108
      %2141 = vst [vmem:[%s334 + $0xe0] sm:$0xff] %v2109
      %2142 = vst [vmem:[%s334 + $0xe8] sm:$0xff] %v2110
      %2143 = vst [vmem:[%s334 + $0xf0] sm:$0xff] %v2111
      %2144 = vst [vmem:[%s334 + $0xf8] sm:$0xff] %v2112
      %s2145 = smul.u32 32, %s20
      %p2146 = scmp.lt.s32.totalorder %s2145, 63
      %s2147 = scalar_select %p2146, %s2145, 63
      %s2148 = smul.addr %s2147, 8
      %s2149 = scalar_lea.vmem %s9, %s2148
      // Predicated region
      $region57: #{feedforward_net_iii.1} parent=55 // pred_check
        %p2150 = pneg %p232
      $region58: #{feedforward_net_iii.1} parent=55 // pred_check_branch
        %2152 = sbr.rel (%p2150) target = $region60
      $region59: #{feedforward_net_iii.1} parent=55 // pred_region
        %s2153 = smul.u32 32, %s20
      $region60: #{feedforward_net_iii.1} parent=55 // pred_fallthru
        _
    $region56: #{feedforward_net_iii.1} parent=5 // pred_fallthru
      _
    %p2154 = scmp.le.s32.totalorder 2, %s15
    // Predicated region
    $region61: #{feedforward_net_iii.1} parent=5 // pred_check
      %p2155 = pneg %p2154
    $region62: #{feedforward_net_iii.1} parent=5 // pred_check_branch
      %2157 = sbr.rel (%p2155) target = $region64
    $region63: #{feedforward_net_iii.1} parent=5 // pred_region
      %s2158 = ssub.s32 %s15, 2
      // Predicated region
      $region65: #{feedforward_net_iii.1} parent=63 // pred_check
        %p2159 = pneg %p238
      $region66: #{feedforward_net_iii.1} parent=63 // pred_check_branch
        %2161 = sbr.rel (%p2159) target = $region68
      $region67: #{feedforward_net_iii.1} parent=63 // pred_region
        %s2162 = smul.u32 32, %s21
        %p2163 = scmp.lt.s32.totalorder %s2162, 63
        %s2164 = scalar_select %p2163, %s2162, 63
        %s2165 = smul.addr %s2164, 8
        %s2166 = scalar_lea.vmem %s9, %s2165
      $region68: #{feedforward_net_iii.1} parent=63 // pred_fallthru
        _
    $region64: #{feedforward_net_iii.1} parent=5 // pred_fallthru
      _
  $region6: #{feedforward_net_iii.1} parent=0 // loop_footer
    %s19 = sadd.s32 1, %s15
  $region7: #{feedforward_net_iii.1} parent=0 // loop_footer_branch
    %14 = sbr.rel target = $region3
  $region8: #{feedforward_net_iii.1} parent=0 // loop_exit
    _

</llo_original>
